<compile_context>
chip_gen: v5e
topology: v5e:2x2
jax: 0.10.0
libtpu: 0.0.40
codegen_flags: <defaults>
</compile_context>

<pallas_src>
import jax
import jax.numpy as jnp
from jax.experimental import pallas as pl
from jax.experimental.pallas import tpu as pltpu

# ----------------------- small-config hyperparameters -----------------------
B = 2            # batch
L = 64           # sequence length (grid points)
D = 128          # d_model (module default 1024; scaled down, kept lane-dense)
NHEAD = 4        # attention heads (module default 16)
DK = D // NHEAD  # per-head dim
DFF = 256        # dim_feedforward (module default 2*d_model)
EPS = 1e-5       # norm_eps


# ------------------------------ fused Pallas kernel ------------------------------
def _galerkin_layer_kernel(x_ref, mask_ref, ln_g_ref, ln_b_ref,
                           wqkv_ref, bqkv_ref, w1_ref, b1_ref,
                           w2_ref, b2_ref, o_ref):
    """One GalerkinTransformer layer on the batch-folded sequence (B*L, D)."""
    x = x_ref[...]                                        # (B*L, D)
    mask = mask_ref[...]                                  # (D, D) block-diag head mask
    ln_g = ln_g_ref[...]
    ln_b = ln_b_ref[...]

    def layernorm(v):
        mu = jnp.mean(v, axis=-1, keepdims=True)
        var = jnp.mean((v - mu) ** 2, axis=-1, keepdims=True)
        return (v - mu) * jax.lax.rsqrt(var + EPS) * ln_g + ln_b

    # ---- x = x + SelfAttention(norm1(x)) ----
    y = layernorm(x)
    qkv = (jnp.dot(y, wqkv_ref[...], preferred_element_type=jnp.float32)
           + bqkv_ref[...])                               # (B*L, 3D), lane-dense
    q = qkv[:, :D]
    k = qkv[:, D:2 * D]
    v = qkv[:, 2 * D:]

    # Galerkin (linear) attention per head, per batch element:
    #   out_b[:, h] = Q_bh @ (K_bh^T V_bh) / L  ==  Q_b @ ((K_b^T V_b / L) * head_mask)
    attn_parts = []
    for b in range(B):                                    # tiny unrolled batch loop
        rows = slice(b * L, (b + 1) * L)
        ctx = jax.lax.dot_general(
            k[rows, :], v[rows, :],
            dimension_numbers=(((0,), (0,)), ((), ())),   # K^T V without a transpose op
            preferred_element_type=jnp.float32) / L       # (D, D)
        attn_parts.append(jnp.dot(q[rows, :], ctx * mask,
                                  preferred_element_type=jnp.float32))
    x = x + jnp.concatenate(attn_parts, axis=0)

    # ---- x = x + FeedForward(norm1(x)) ----
    y2 = layernorm(x)
    h = jnp.maximum(jnp.dot(y2, w1_ref[...], preferred_element_type=jnp.float32)
                    + b1_ref[...], 0.0)                   # ReLU
    x = x + (jnp.dot(h, w2_ref[...], preferred_element_type=jnp.float32)
             + b2_ref[...])

    o_ref[...] = x.astype(o_ref.dtype)


# ------------------------------ model wrapper -------------------------------
def _head_mask():
    row = jnp.arange(D)[:, None] // DK
    col = jnp.arange(D)[None, :] // DK
    return (row == col).astype(jnp.float32)


def galerkin_transformer_forward(x, memory, params):
    """GalerkinTransformer.forward(x, memory) with layer_norm=False (default).

    `memory` is unused on this path (cross-attention only exists when
    layer_norm=True); accepted for signature parity with the PyTorch module.
    """
    del memory
    B_, L_, D_ = x.shape
    x_flat = x.reshape(B_ * L_, D_)                       # fold batch into rows

    out = pl.pallas_call(
        _galerkin_layer_kernel,
        out_shape=jax.ShapeDtypeStruct((B_ * L_, D_), jnp.float32),
    )(x_flat, _head_mask(),
      params["ln_g"], params["ln_b"],
      params["wqkv"], params["bqkv"],
      params["w1"], params["b1"],
      params["w2"], params["b2"])
    return out.reshape(B_, L_, D_)


# ----------------------------- pure-JAX reference ----------------------------
def galerkin_transformer_reference(x, memory, params):
    del memory
    B_, L_, _ = x.shape

    def ln(v):
        mu = v.mean(-1, keepdims=True)
        var = ((v - mu) ** 2).mean(-1, keepdims=True)
        return (v - mu) / jnp.sqrt(var + EPS) * params["ln_g"] + params["ln_b"]

    # self-attention block (per-head Galerkin linear attention)
    y = ln(x)
    qkv = y @ params["wqkv"] + params["bqkv"]
    q, k, v = qkv[..., :D], qkv[..., D:2 * D], qkv[..., 2 * D:]
    qh = q.reshape(B_, L_, NHEAD, DK).transpose(0, 2, 1, 3)
    kh = k.reshape(B_, L_, NHEAD, DK).transpose(0, 2, 1, 3)
    vh = v.reshape(B_, L_, NHEAD, DK).transpose(0, 2, 1, 3)
    ctx = jnp.einsum("bhld,bhle->bhde", kh, vh) / L_
    attn = jnp.einsum("bhld,bhde->bhle", qh, ctx)
    attn = attn.transpose(0, 2, 1, 3).reshape(B_, L_, D)
    x1 = x + attn

    # feed-forward block
    y2 = ln(x1)
    ff = jax.nn.relu(y2 @ params["w1"] + params["b1"]) @ params["w2"] + params["b2"]
    return x1 + ff


# -------------------------------- parameters ---------------------------------
def init_params(key):
    def nrm(k, shape, scale=0.02):
        return scale * jax.random.normal(k, shape, dtype=jnp.float32)

    ks = jax.random.split(key, 6)
    return {
        "ln_g": jnp.ones((1, D), jnp.float32),
        "ln_b": jnp.zeros((1, D), jnp.float32),
        # fused QKV projection: (D, 3D), columns ordered [Wq | Wk | Wv]
        "wqkv": nrm(ks[0], (D, 3 * D)), "bqkv": nrm(ks[1], (1, 3 * D), 0.01),
        "w1": nrm(ks[2], (D, DFF)), "b1": nrm(ks[3], (1, DFF), 0.01),
        "w2": nrm(ks[4], (DFF, D)), "b2": nrm(ks[5], (1, D), 0.01),
    }


# ----------------------------------- main ------------------------------------
if __name__ == "__main__":
    key = jax.random.PRNGKey(0)
    kx, km, kp = jax.random.split(key, 3)

    x = jax.random.normal(kx, (B, L, D), dtype=jnp.float32)
    memory = jax.random.normal(km, (B, L, D), dtype=jnp.float32)  # unused (default path)
    params = init_params(kp)

    out = jax.block_until_ready(galerkin_transformer_forward(x, memory, params))
    ref = jax.block_until_ready(galerkin_transformer_reference(x, memory, params))

    assert out.shape == (B, L, D), out.shape
    assert jnp.allclose(out, ref, rtol=1e-2, atol=1e-3), (
        float(jnp.max(jnp.abs(out - ref))))

    print("KERNEL_OK")
</pallas_src>

<mosaic_0001>
module attributes {stable_mosaic.version = 11 : i64} {
  func.func @_galerkin_layer_kernel(%arg0: memref<128x128xf32, #tpu.memory_space<vmem>>, %arg1: memref<128x128xf32, #tpu.memory_space<vmem>>, %arg2: memref<1x128xf32, #tpu.memory_space<vmem>>, %arg3: memref<1x128xf32, #tpu.memory_space<vmem>>, %arg4: memref<128x384xf32, #tpu.memory_space<vmem>>, %arg5: memref<1x384xf32, #tpu.memory_space<vmem>>, %arg6: memref<128x256xf32, #tpu.memory_space<vmem>>, %arg7: memref<1x256xf32, #tpu.memory_space<vmem>>, %arg8: memref<256x128xf32, #tpu.memory_space<vmem>>, %arg9: memref<1x128xf32, #tpu.memory_space<vmem>>, %arg10: memref<128x128xf32, #tpu.memory_space<vmem>>) attributes {dimension_semantics = [], scalar_prefetch = 0 : i64, scratch_operands = 0 : i64, tpu.core_type = #tpu.core_type<tc>} {
    %c0 = arith.constant 0 : index
    %c0_0 = arith.constant 0 : index
    %0 = vector.load %arg0[%c0, %c0_0] : memref<128x128xf32, #tpu.memory_space<vmem>>, vector<128x128xf32>
    %c0_1 = arith.constant 0 : index
    %c0_2 = arith.constant 0 : index
    %1 = vector.load %arg1[%c0_1, %c0_2] : memref<128x128xf32, #tpu.memory_space<vmem>>, vector<128x128xf32>
    %c0_3 = arith.constant 0 : index
    %c0_4 = arith.constant 0 : index
    %2 = vector.load %arg2[%c0_3, %c0_4] : memref<1x128xf32, #tpu.memory_space<vmem>>, vector<1x128xf32>
    %c0_5 = arith.constant 0 : index
    %c0_6 = arith.constant 0 : index
    %3 = vector.load %arg3[%c0_5, %c0_6] : memref<1x128xf32, #tpu.memory_space<vmem>>, vector<1x128xf32>
    %cst = arith.constant dense<0.000000e+00> : vector<128xf32>
    %4 = vector.multi_reduction <add>, %0, %cst [1] : vector<128x128xf32> to vector<128xf32>
    %5 = vector.shape_cast %4 : vector<128xf32> to vector<128x1xf32>
    %cst_7 = arith.constant 1.280000e+02 : f32
    %6 = vector.broadcast %cst_7 : f32 to vector<128x1xf32>
    %7 = arith.divf %5, %6 : vector<128x1xf32>
    %8 = vector.broadcast %7 : vector<128x1xf32> to vector<128x128xf32>
    %9 = arith.subf %0, %8 : vector<128x128xf32>
    %10 = arith.mulf %9, %9 : vector<128x128xf32>
    %cst_8 = arith.constant dense<0.000000e+00> : vector<128xf32>
    %11 = vector.multi_reduction <add>, %10, %cst_8 [1] : vector<128x128xf32> to vector<128xf32>
    %12 = vector.shape_cast %11 : vector<128xf32> to vector<128x1xf32>
    %cst_9 = arith.constant 1.280000e+02 : f32
    %13 = vector.broadcast %cst_9 : f32 to vector<128x1xf32>
    %14 = arith.divf %12, %13 : vector<128x1xf32>
    %15 = vector.broadcast %7 : vector<128x1xf32> to vector<128x128xf32>
    %16 = arith.subf %0, %15 : vector<128x128xf32>
    %cst_10 = arith.constant 9.99999974E-6 : f32
    %17 = vector.broadcast %cst_10 : f32 to vector<128x1xf32>
    %18 = arith.addf %14, %17 : vector<128x1xf32>
    %19 = math.rsqrt %18 : vector<128x1xf32>
    %20 = vector.broadcast %19 : vector<128x1xf32> to vector<128x128xf32>
    %21 = arith.mulf %16, %20 : vector<128x128xf32>
    %22 = vector.broadcast %2 : vector<1x128xf32> to vector<128x128xf32>
    %23 = arith.mulf %21, %22 : vector<128x128xf32>
    %24 = vector.broadcast %3 : vector<1x128xf32> to vector<128x128xf32>
    %25 = arith.addf %23, %24 : vector<128x128xf32>
    %c0_11 = arith.constant 0 : index
    %c0_12 = arith.constant 0 : index
    %26 = vector.load %arg4[%c0_11, %c0_12] : memref<128x384xf32, #tpu.memory_space<vmem>>, vector<128x384xf32>
    %cst_13 = arith.constant dense<0.000000e+00> : vector<128x384xf32>
    %27 = tpu.matmul %25, %26, %cst_13 {dimension_numbers = #tpu.dot_dimension_numbers<[1], [0], [0], [1], [0, 0, 1, 1], [], []>} : vector<128x128xf32>, vector<128x384xf32>, vector<128x384xf32> -> vector<128x384xf32>
    %c0_14 = arith.constant 0 : index
    %c0_15 = arith.constant 0 : index
    %28 = vector.load %arg5[%c0_14, %c0_15] : memref<1x384xf32, #tpu.memory_space<vmem>>, vector<1x384xf32>
    %29 = vector.broadcast %28 : vector<1x384xf32> to vector<128x384xf32>
    %30 = arith.addf %27, %29 : vector<128x384xf32>
    %31 = vector.extract_strided_slice %30 {offsets = [0, 0], sizes = [128, 128], strides = [1, 1]} : vector<128x384xf32> to vector<128x128xf32>
    %32 = vector.extract_strided_slice %30 {offsets = [0, 128], sizes = [128, 128], strides = [1, 1]} : vector<128x384xf32> to vector<128x128xf32>
    %33 = vector.extract_strided_slice %30 {offsets = [0, 256], sizes = [128, 128], strides = [1, 1]} : vector<128x384xf32> to vector<128x128xf32>
    %34 = vector.extract_strided_slice %32 {offsets = [0, 0], sizes = [64, 128], strides = [1, 1]} : vector<128x128xf32> to vector<64x128xf32>
    %35 = vector.extract_strided_slice %33 {offsets = [0, 0], sizes = [64, 128], strides = [1, 1]} : vector<128x128xf32> to vector<64x128xf32>
    %cst_16 = arith.constant dense<0.000000e+00> : vector<128x128xf32>
    %36 = tpu.matmul %34, %35, %cst_16 {dimension_numbers = #tpu.dot_dimension_numbers<[0], [0], [1], [1], [0, 1, 1, 1], [], []>} : vector<64x128xf32>, vector<64x128xf32>, vector<128x128xf32> -> vector<128x128xf32>
    %cst_17 = arith.constant 6.400000e+01 : f32
    %37 = vector.broadcast %cst_17 : f32 to vector<128x128xf32>
    %38 = arith.divf %36, %37 : vector<128x128xf32>
    %39 = vector.extract_strided_slice %31 {offsets = [0, 0], sizes = [64, 128], strides = [1, 1]} : vector<128x128xf32> to vector<64x128xf32>
    %40 = arith.mulf %38, %1 : vector<128x128xf32>
    %cst_18 = arith.constant dense<0.000000e+00> : vector<64x128xf32>
    %41 = tpu.matmul %39, %40, %cst_18 {dimension_numbers = #tpu.dot_dimension_numbers<[1], [0], [0], [1], [0, 0, 1, 1], [], []>} : vector<64x128xf32>, vector<128x128xf32>, vector<64x128xf32> -> vector<64x128xf32>
    %42 = vector.extract_strided_slice %32 {offsets = [64, 0], sizes = [64, 128], strides = [1, 1]} : vector<128x128xf32> to vector<64x128xf32>
    %43 = vector.extract_strided_slice %33 {offsets = [64, 0], sizes = [64, 128], strides = [1, 1]} : vector<128x128xf32> to vector<64x128xf32>
    %cst_19 = arith.constant dense<0.000000e+00> : vector<128x128xf32>
    %44 = tpu.matmul %42, %43, %cst_19 {dimension_numbers = #tpu.dot_dimension_numbers<[0], [0], [1], [1], [0, 1, 1, 1], [], []>} : vector<64x128xf32>, vector<64x128xf32>, vector<128x128xf32> -> vector<128x128xf32>
    %cst_20 = arith.constant 6.400000e+01 : f32
    %45 = vector.broadcast %cst_20 : f32 to vector<128x128xf32>
    %46 = arith.divf %44, %45 : vector<128x128xf32>
    %47 = vector.extract_strided_slice %31 {offsets = [64, 0], sizes = [64, 128], strides = [1, 1]} : vector<128x128xf32> to vector<64x128xf32>
    %48 = arith.mulf %46, %1 : vector<128x128xf32>
    %cst_21 = arith.constant dense<0.000000e+00> : vector<64x128xf32>
    %49 = tpu.matmul %47, %48, %cst_21 {dimension_numbers = #tpu.dot_dimension_numbers<[1], [0], [0], [1], [0, 0, 1, 1], [], []>} : vector<64x128xf32>, vector<128x128xf32>, vector<64x128xf32> -> vector<64x128xf32>
    %50 = tpu.concatenate %41, %49 in 0 : vector<64x128xf32>, vector<64x128xf32> -> vector<128x128xf32>
    %51 = arith.addf %0, %50 : vector<128x128xf32>
    %cst_22 = arith.constant dense<0.000000e+00> : vector<128xf32>
    %52 = vector.multi_reduction <add>, %51, %cst_22 [1] : vector<128x128xf32> to vector<128xf32>
    %53 = vector.shape_cast %52 : vector<128xf32> to vector<128x1xf32>
    %cst_23 = arith.constant 1.280000e+02 : f32
    %54 = vector.broadcast %cst_23 : f32 to vector<128x1xf32>
    %55 = arith.divf %53, %54 : vector<128x1xf32>
    %56 = vector.broadcast %55 : vector<128x1xf32> to vector<128x128xf32>
    %57 = arith.subf %51, %56 : vector<128x128xf32>
    %58 = arith.mulf %57, %57 : vector<128x128xf32>
    %cst_24 = arith.constant dense<0.000000e+00> : vector<128xf32>
    %59 = vector.multi_reduction <add>, %58, %cst_24 [1] : vector<128x128xf32> to vector<128xf32>
    %60 = vector.shape_cast %59 : vector<128xf32> to vector<128x1xf32>
    %cst_25 = arith.constant 1.280000e+02 : f32
    %61 = vector.broadcast %cst_25 : f32 to vector<128x1xf32>
    %62 = arith.divf %60, %61 : vector<128x1xf32>
    %63 = vector.broadcast %55 : vector<128x1xf32> to vector<128x128xf32>
    %64 = arith.subf %51, %63 : vector<128x128xf32>
    %cst_26 = arith.constant 9.99999974E-6 : f32
    %65 = vector.broadcast %cst_26 : f32 to vector<128x1xf32>
    %66 = arith.addf %62, %65 : vector<128x1xf32>
    %67 = math.rsqrt %66 : vector<128x1xf32>
    %68 = vector.broadcast %67 : vector<128x1xf32> to vector<128x128xf32>
    %69 = arith.mulf %64, %68 : vector<128x128xf32>
    %70 = vector.broadcast %2 : vector<1x128xf32> to vector<128x128xf32>
    %71 = arith.mulf %69, %70 : vector<128x128xf32>
    %72 = vector.broadcast %3 : vector<1x128xf32> to vector<128x128xf32>
    %73 = arith.addf %71, %72 : vector<128x128xf32>
    %c0_27 = arith.constant 0 : index
    %c0_28 = arith.constant 0 : index
    %74 = vector.load %arg6[%c0_27, %c0_28] : memref<128x256xf32, #tpu.memory_space<vmem>>, vector<128x256xf32>
    %cst_29 = arith.constant dense<0.000000e+00> : vector<128x256xf32>
    %75 = tpu.matmul %73, %74, %cst_29 {dimension_numbers = #tpu.dot_dimension_numbers<[1], [0], [0], [1], [0, 0, 1, 1], [], []>} : vector<128x128xf32>, vector<128x256xf32>, vector<128x256xf32> -> vector<128x256xf32>
    %c0_30 = arith.constant 0 : index
    %c0_31 = arith.constant 0 : index
    %76 = vector.load %arg7[%c0_30, %c0_31] : memref<1x256xf32, #tpu.memory_space<vmem>>, vector<1x256xf32>
    %77 = vector.broadcast %76 : vector<1x256xf32> to vector<128x256xf32>
    %78 = arith.addf %75, %77 : vector<128x256xf32>
    %cst_32 = arith.constant 0.000000e+00 : f32
    %79 = vector.broadcast %cst_32 : f32 to vector<128x256xf32>
    %80 = arith.maximumf %78, %79 : vector<128x256xf32>
    %c0_33 = arith.constant 0 : index
    %c0_34 = arith.constant 0 : index
    %81 = vector.load %arg8[%c0_33, %c0_34] : memref<256x128xf32, #tpu.memory_space<vmem>>, vector<256x128xf32>
    %cst_35 = arith.constant dense<0.000000e+00> : vector<128x128xf32>
    %82 = tpu.matmul %80, %81, %cst_35 {dimension_numbers = #tpu.dot_dimension_numbers<[1], [0], [0], [1], [0, 0, 1, 1], [], []>} : vector<128x256xf32>, vector<256x128xf32>, vector<128x128xf32> -> vector<128x128xf32>
    %c0_36 = arith.constant 0 : index
    %c0_37 = arith.constant 0 : index
    %83 = vector.load %arg9[%c0_36, %c0_37] : memref<1x128xf32, #tpu.memory_space<vmem>>, vector<1x128xf32>
    %84 = vector.broadcast %83 : vector<1x128xf32> to vector<128x128xf32>
    %85 = arith.addf %82, %84 : vector<128x128xf32>
    %86 = arith.addf %51, %85 : vector<128x128xf32>
    %c0_38 = arith.constant 0 : index
    %c0_39 = arith.constant 0 : index
    %87 = vector.load %arg10[%c0_38, %c0_39] : memref<128x128xf32, #tpu.memory_space<vmem>>, vector<128x128xf32>
    tpu.vector_store %arg10[%c0_38, %c0_39], %86 {strides = array<i32>} : memref<128x128xf32, #tpu.memory_space<vmem>>, vector<128x128xf32>,
    return
  }
}

</mosaic_0001>

<llo_original>
// kernel: tpu_custom_call.1
$region0: #{tpu_custom_call.1}
  #allocation0 [shape = 'u32[]', space=smem, size = 0x4, offset = 0x4, fixed_abs, tag = 'smem constant byte address 0x4 - core index']
  #allocation1 [shape = 'u32[72,128]{1,0:T(1,128)}', space=vmem, size = 0x9000, scoped, tag = 'internal scratch']
  %s0 = inlined_call_operand.hbm [shape: f32[128,128], index: 0, kind: input, shape index: {}]
  %s1 = inlined_call_operand.hbm [shape: f32[128,128], index: 1, kind: input, shape index: {}]
  %s2 = inlined_call_operand.hbm [shape: f32[1,128], index: 2, kind: input, shape index: {}]
  %s3 = inlined_call_operand.hbm [shape: f32[1,128], index: 3, kind: input, shape index: {}]
  %s4 = inlined_call_operand.hbm [shape: f32[128,384], index: 4, kind: input, shape index: {}]
  %s5 = inlined_call_operand.vmem [shape: f32[1,384], index: 5, kind: input, shape index: {}]
  %s6 = inlined_call_operand.hbm [shape: f32[128,256], index: 6, kind: input, shape index: {}]
  %s7 = inlined_call_operand.vmem [shape: f32[1,256], index: 7, kind: input, shape index: {}]
  %s8 = inlined_call_operand.hbm [shape: f32[256,128], index: 8, kind: input, shape index: {}]
  %s9 = inlined_call_operand.vmem [shape: f32[1,128], index: 9, kind: input, shape index: {}]
  %s10 = inlined_call_operand.hbm [shape: f32[128,128], index: 10, kind: output, shape index: {}]
  %s11 = sld [smem:[#allocation0]]
  $region78: #{tpu_custom_call.1} parent=0
    _
  %s13 = ssub.s32 1, %s11
  %s14 = scalar_select 0, %s13, %s11
  $region1: #{tpu_custom_call.1} parent=0
    #allocation2 [shape = 'u8[65536]{0}', space=vmem, size = 0x10000, scoped, tag = 'input window, operand 0, single buffered']
    #allocation3 [shape = 's32[1]{0}', space=sflag, size = 0x4, scoped, tag = 'scoped memory for tpu_custom_call.1']
    #allocation4 [shape = 's32[1]{0}', space=sflag, size = 0x4, scoped, tag = 'scoped memory for tpu_custom_call.1']
    #allocation5 [shape = 'u8[65536]{0}', space=vmem, size = 0x10000, scoped, tag = 'input window, operand 1, single buffered']
    #allocation6 [shape = 's32[1]{0}', space=sflag, size = 0x4, scoped, tag = 'scoped memory for tpu_custom_call.1']
    #allocation7 [shape = 'u8[512]{0}', space=vmem, size = 0x400, scoped, tag = 'input window, operand 2, single buffered']
    #allocation8 [shape = 'u8[512]{0}', space=vmem, size = 0x400, scoped, tag = 'input window, operand 3, single buffered']
    #allocation9 [shape = 's32[1]{0}', space=sflag, size = 0x4, scoped, tag = 'scoped memory for tpu_custom_call.1']
    #allocation10 [shape = 'u8[196608]{0}', space=vmem, size = 0x30000, scoped, tag = 'input window, operand 4, single buffered']
    #allocation11 [shape = 'u8[131072]{0}', space=vmem, size = 0x20000, scoped, tag = 'input window, operand 6, single buffered']
    #allocation12 [shape = 's32[1]{0}', space=sflag, size = 0x4, scoped, tag = 'scoped memory for tpu_custom_call.1']
    #allocation13 [shape = 'u8[131072]{0}', space=vmem, size = 0x20000, scoped, tag = 'input window, operand 8, single buffered']
    #allocation14 [shape = 'u8[65536]{0}', space=vmem, size = 0x10000, scoped, tag = 'output window, operand 0, single buffered']
    %15 = vsyncpa [#allocation3], 0
    %16 = vsyncpa [#allocation6], 0
    %17 = vsyncpa [#allocation9], 0
    %18 = vsyncpa [#allocation12], 0
    %19 = vsyncpa [#allocation4], 0
    // Predicated region
    $region2: #{tpu_custom_call.1} parent=1 // pred_check
      _
    $region3: #{tpu_custom_call.1} parent=1 // pred_check_branch
      %21 = sbr.rel (0) target = $region5
    $region4: #{tpu_custom_call.1} parent=1 // pred_region
      %23 = vsyncadd [#allocation3], 0
      %s24 = sshll.u32 %s0, 4
      %s25 = int_to_ptr.hbm [resolvable:$true] %s24
      %s26 = sshll.u32 [#allocation2], 4
      %s27 = int_to_ptr.vmem [resolvable:$true] %s26
      %32 = dma.hbm_to_vmem [thread:$0]  %s25, 2048, %s27, [#allocation3], 128, 128, 8
    $region5: #{tpu_custom_call.1} parent=1 // pred_fallthru
      _
    // Predicated region
    $region6: #{tpu_custom_call.1} parent=1 // pred_check
      _
    $region7: #{tpu_custom_call.1} parent=1 // pred_check_branch
      %34 = sbr.rel (0) target = $region9
    $region8: #{tpu_custom_call.1} parent=1 // pred_region
      %36 = vsyncadd [#allocation6], 0
      %s37 = sshll.u32 %s1, 4
      %s38 = int_to_ptr.hbm [resolvable:$true] %s37
      %s39 = sshll.u32 [#allocation5], 4
      %s40 = int_to_ptr.vmem [resolvable:$true] %s39
      %45 = dma.hbm_to_vmem [thread:$0]  %s38, 2048, %s40, [#allocation6], 128, 128, 8
    $region9: #{tpu_custom_call.1} parent=1 // pred_fallthru
      _
    // Predicated region
    $region10: #{tpu_custom_call.1} parent=1 // pred_check
      _
    $region11: #{tpu_custom_call.1} parent=1 // pred_check_branch
      %47 = sbr.rel (0) target = $region13
    $region12: #{tpu_custom_call.1} parent=1 // pred_region
      %49 = vsyncadd [#allocation6], 0
      %s51 = sshll.u32 %s2, 4
      %s52 = int_to_ptr.hbm [resolvable:$true] %s51
      %s53 = sshll.u32 [#allocation7], 4
      %s54 = int_to_ptr.vmem [resolvable:$true] %s53
      %56 = dma.hbm_to_vmem [thread:$0]  %s52, 16, %s54, [#allocation6]
    $region13: #{tpu_custom_call.1} parent=1 // pred_fallthru
      _
    // Predicated region
    $region14: #{tpu_custom_call.1} parent=1 // pred_check
      _
    $region15: #{tpu_custom_call.1} parent=1 // pred_check_branch
      %58 = sbr.rel (0) target = $region17
    $region16: #{tpu_custom_call.1} parent=1 // pred_region
      %60 = vsyncadd [#allocation9], 0
      %s62 = sshll.u32 %s3, 4
      %s63 = int_to_ptr.hbm [resolvable:$true] %s62
      %s64 = sshll.u32 [#allocation8], 4
      %s65 = int_to_ptr.vmem [resolvable:$true] %s64
      %67 = dma.hbm_to_vmem [thread:$0]  %s63, 16, %s65, [#allocation9]
    $region17: #{tpu_custom_call.1} parent=1 // pred_fallthru
      _
    // Predicated region
    $region18: #{tpu_custom_call.1} parent=1 // pred_check
      _
    $region19: #{tpu_custom_call.1} parent=1 // pred_check_branch
      %69 = sbr.rel (0) target = $region21
    $region20: #{tpu_custom_call.1} parent=1 // pred_region
      %71 = vsyncadd [#allocation9], 0
      %s72 = sshll.u32 %s4, 4
      %s73 = int_to_ptr.hbm [resolvable:$true] %s72
      %s74 = sshll.u32 [#allocation10], 4
      %s75 = int_to_ptr.vmem [resolvable:$true] %s74
      %80 = dma.hbm_to_vmem [thread:$0]  %s73, 6144, %s75, [#allocation9], 384, 384, 24
    $region21: #{tpu_custom_call.1} parent=1 // pred_fallthru
      _
    // Predicated region
    $region22: #{tpu_custom_call.1} parent=1 // pred_check
      _
    $region23: #{tpu_custom_call.1} parent=1 // pred_check_branch
      %82 = sbr.rel (0) target = $region25
    $region24: #{tpu_custom_call.1} parent=1 // pred_region
      _
    $region25: #{tpu_custom_call.1} parent=1 // pred_fallthru
      _
    // Predicated region
    $region26: #{tpu_custom_call.1} parent=1 // pred_check
      _
    $region27: #{tpu_custom_call.1} parent=1 // pred_check_branch
      %84 = sbr.rel (0) target = $region29
    $region28: #{tpu_custom_call.1} parent=1 // pred_region
      %86 = vsyncadd [#allocation12], 0
      %s87 = sshll.u32 %s6, 4
      %s88 = int_to_ptr.hbm [resolvable:$true] %s87
      %s89 = sshll.u32 [#allocation11], 4
      %s90 = int_to_ptr.vmem [resolvable:$true] %s89
      %95 = dma.hbm_to_vmem [thread:$0]  %s88, 4096, %s90, [#allocation12], 256, 256, 16
    $region29: #{tpu_custom_call.1} parent=1 // pred_fallthru
      _
    // Predicated region
    $region30: #{tpu_custom_call.1} parent=1 // pred_check
      _
    $region31: #{tpu_custom_call.1} parent=1 // pred_check_branch
      %97 = sbr.rel (0) target = $region33
    $region32: #{tpu_custom_call.1} parent=1 // pred_region
      _
    $region33: #{tpu_custom_call.1} parent=1 // pred_fallthru
      _
    // Predicated region
    $region34: #{tpu_custom_call.1} parent=1 // pred_check
      _
    $region35: #{tpu_custom_call.1} parent=1 // pred_check_branch
      %99 = sbr.rel (0) target = $region37
    $region36: #{tpu_custom_call.1} parent=1 // pred_region
      %101 = vsyncadd [#allocation12], 0
      %s102 = sshll.u32 %s8, 4
      %s103 = int_to_ptr.hbm [resolvable:$true] %s102
      %s104 = sshll.u32 [#allocation13], 4
      %s105 = int_to_ptr.vmem [resolvable:$true] %s104
      %110 = dma.hbm_to_vmem [thread:$0]  %s103, 4096, %s105, [#allocation12], 128, 128, 8
    $region37: #{tpu_custom_call.1} parent=1 // pred_fallthru
      _
    // Predicated region
    $region38: #{tpu_custom_call.1} parent=1 // pred_check
      _
    $region39: #{tpu_custom_call.1} parent=1 // pred_check_branch
      %112 = sbr.rel (0) target = $region41
    $region40: #{tpu_custom_call.1} parent=1 // pred_region
      _
    $region41: #{tpu_custom_call.1} parent=1 // pred_fallthru
      _
    // Predicated region
    $region42: #{tpu_custom_call.1} parent=1 // pred_check
      _
    $region43: #{tpu_custom_call.1} parent=1 // pred_check_branch
      %114 = sbr.rel (0) target = $region45
    $region44: #{tpu_custom_call.1} parent=1 // pred_region
      %116 = dma.done [#allocation3], 2048
    $region45: #{tpu_custom_call.1} parent=1 // pred_fallthru
      _
    // Predicated region
    $region46: #{tpu_custom_call.1} parent=1 // pred_check
      _
    $region47: #{tpu_custom_call.1} parent=1 // pred_check_branch
      %118 = sbr.rel (0) target = $region49
    $region48: #{tpu_custom_call.1} parent=1 // pred_region
      %120 = dma.done [#allocation6], 2048
    $region49: #{tpu_custom_call.1} parent=1 // pred_fallthru
      _
    // Predicated region
    $region50: #{tpu_custom_call.1} parent=1 // pred_check
      _
    $region51: #{tpu_custom_call.1} parent=1 // pred_check_branch
      %122 = sbr.rel (0) target = $region53
    $region52: #{tpu_custom_call.1} parent=1 // pred_region
      %124 = dma.done [#allocation6], 16
    $region53: #{tpu_custom_call.1} parent=1 // pred_fallthru
      _
    // Predicated region
    $region54: #{tpu_custom_call.1} parent=1 // pred_check
      _
    $region55: #{tpu_custom_call.1} parent=1 // pred_check_branch
      %126 = sbr.rel (0) target = $region57
    $region56: #{tpu_custom_call.1} parent=1 // pred_region
      %128 = dma.done [#allocation9], 16
    $region57: #{tpu_custom_call.1} parent=1 // pred_fallthru
      _
    // Predicated region
    $region58: #{tpu_custom_call.1} parent=1 // pred_check
      _
    $region59: #{tpu_custom_call.1} parent=1 // pred_check_branch
      %130 = sbr.rel (0) target = $region61
    $region60: #{tpu_custom_call.1} parent=1 // pred_region
      %132 = dma.done [#allocation9], 6144
    $region61: #{tpu_custom_call.1} parent=1 // pred_fallthru
      _
    // Predicated region
    $region62: #{tpu_custom_call.1} parent=1 // pred_check
      _
    $region63: #{tpu_custom_call.1} parent=1 // pred_check_branch
      %134 = sbr.rel (0) target = $region65
    $region64: #{tpu_custom_call.1} parent=1 // pred_region
      %136 = dma.done [#allocation12], 4096
    $region65: #{tpu_custom_call.1} parent=1 // pred_fallthru
      _
    // Predicated region
    $region66: #{tpu_custom_call.1} parent=1 // pred_check
      _
    $region67: #{tpu_custom_call.1} parent=1 // pred_check_branch
      %138 = sbr.rel (0) target = $region69
    $region68: #{tpu_custom_call.1} parent=1 // pred_region
      %140 = dma.done [#allocation12], 4096
    $region69: #{tpu_custom_call.1} parent=1 // pred_fallthru
      _
    %v141 = vld [vmem:[#allocation2] sm:$0xff]
    %v142 = vld [vmem:[#allocation2 + $0x8] sm:$0xff]
    %v143 = vld [vmem:[#allocation2 + $0x10] sm:$0xff]
    %v144 = vld [vmem:[#allocation2 + $0x18] sm:$0xff]
    %v145 = vld [vmem:[#allocation2 + $0x20] sm:$0xff]
    %v146 = vld [vmem:[#allocation2 + $0x28] sm:$0xff]
    %v147 = vld [vmem:[#allocation2 + $0x30] sm:$0xff]
    %v148 = vld [vmem:[#allocation2 + $0x38] sm:$0xff]
    %v149 = vld [vmem:[#allocation2 + $0x40] sm:$0xff]
    %v150 = vld [vmem:[#allocation2 + $0x48] sm:$0xff]
    %v151 = vld [vmem:[#allocation2 + $0x50] sm:$0xff]
    %v152 = vld [vmem:[#allocation2 + $0x58] sm:$0xff]
    %v153 = vld [vmem:[#allocation2 + $0x60] sm:$0xff]
    %v154 = vld [vmem:[#allocation2 + $0x68] sm:$0xff]
    %v155 = vld [vmem:[#allocation2 + $0x70] sm:$0xff]
    %v156 = vld [vmem:[#allocation2 + $0x78] sm:$0xff]
    %v157 = vld [vmem:[#allocation5] sm:$0xff]
    %v158 = vld [vmem:[#allocation5 + $0x8] sm:$0xff]
    %v159 = vld [vmem:[#allocation5 + $0x10] sm:$0xff]
    %v160 = vld [vmem:[#allocation5 + $0x18] sm:$0xff]
    %v161 = vld [vmem:[#allocation5 + $0x20] sm:$0xff]
    %v162 = vld [vmem:[#allocation5 + $0x28] sm:$0xff]
    %v163 = vld [vmem:[#allocation5 + $0x30] sm:$0xff]
    %v164 = vld [vmem:[#allocation5 + $0x38] sm:$0xff]
    %v165 = vld [vmem:[#allocation5 + $0x40] sm:$0xff]
    %v166 = vld [vmem:[#allocation5 + $0x48] sm:$0xff]
    %v167 = vld [vmem:[#allocation5 + $0x50] sm:$0xff]
    %v168 = vld [vmem:[#allocation5 + $0x58] sm:$0xff]
    %v169 = vld [vmem:[#allocation5 + $0x60] sm:$0xff]
    %v170 = vld [vmem:[#allocation5 + $0x68] sm:$0xff]
    %v171 = vld [vmem:[#allocation5 + $0x70] sm:$0xff]
    %v172 = vld [vmem:[#allocation5 + $0x78] sm:$0xff]
    %v173 = vld [vmem:[#allocation7] sm:$0x1]
    %v174 = vld [vmem:[#allocation8] sm:$0x1]
    %175 = vadd.xlane.f32.xlu0 %v141
    %v176 = vpop.xlane.xlu0 %175
    %177 = vadd.xlane.f32.xlu0 %v142
    %v178 = vpop.xlane.xlu0 %177
    %179 = vadd.xlane.f32.xlu0 %v143
    %v180 = vpop.xlane.xlu0 %179
    %181 = vadd.xlane.f32.xlu0 %v144
    %v182 = vpop.xlane.xlu0 %181
    %183 = vadd.xlane.f32.xlu0 %v145
    %v184 = vpop.xlane.xlu0 %183
    %185 = vadd.xlane.f32.xlu0 %v146
    %v186 = vpop.xlane.xlu0 %185
    %187 = vadd.xlane.f32.xlu0 %v147
    %v188 = vpop.xlane.xlu0 %187
    %189 = vadd.xlane.f32.xlu0 %v148
    %v190 = vpop.xlane.xlu0 %189
    %191 = vadd.xlane.f32.xlu0 %v149
    %v192 = vpop.xlane.xlu0 %191
    %193 = vadd.xlane.f32.xlu0 %v150
    %v194 = vpop.xlane.xlu0 %193
    %195 = vadd.xlane.f32.xlu0 %v151
    %v196 = vpop.xlane.xlu0 %195
    %197 = vadd.xlane.f32.xlu0 %v152
    %v198 = vpop.xlane.xlu0 %197
    %199 = vadd.xlane.f32.xlu0 %v153
    %v200 = vpop.xlane.xlu0 %199
    %201 = vadd.xlane.f32.xlu0 %v154
    %v202 = vpop.xlane.xlu0 %201
    %203 = vadd.xlane.f32.xlu0 %v155
    %v204 = vpop.xlane.xlu0 %203
    %205 = vadd.xlane.f32.xlu0 %v156
    %v206 = vpop.xlane.xlu0 %205
    %v207 = vrcp.pop 128.0
    %v208 = vmul.f32 128.0, %v207
    %v209 = vsub.f32 1.0, %v208
    %v210 = vmul.f32 %v207, %v209
    %v211 = vadd.f32 %v207, %v210
    %vm212 = vweird.f32 %v207
    %v213 = vsel %vm212, %v207, %v211
    %v214 = vmul.f32 %v176, %v213
    %v215 = vmul.f32 %v178, %v213
    %v216 = vmul.f32 %v180, %v213
    %v217 = vmul.f32 %v182, %v213
    %v218 = vmul.f32 %v184, %v213
    %v219 = vmul.f32 %v186, %v213
    %v220 = vmul.f32 %v188, %v213
    %v221 = vmul.f32 %v190, %v213
    %v222 = vmul.f32 %v192, %v213
    %v223 = vmul.f32 %v194, %v213
    %v224 = vmul.f32 %v196, %v213
    %v225 = vmul.f32 %v198, %v213
    %v226 = vmul.f32 %v200, %v213
    %v227 = vmul.f32 %v202, %v213
    %v228 = vmul.f32 %v204, %v213
    %v229 = vmul.f32 %v206, %v213
    %v230 = vsub.f32 %v141, %v214
    %v231 = vsub.f32 %v142, %v215
    %v232 = vsub.f32 %v143, %v216
    %v233 = vsub.f32 %v144, %v217
    %v234 = vsub.f32 %v145, %v218
    %v235 = vsub.f32 %v146, %v219
    %v236 = vsub.f32 %v147, %v220
    %v237 = vsub.f32 %v148, %v221
    %v238 = vsub.f32 %v149, %v222
    %v239 = vsub.f32 %v150, %v223
    %v240 = vsub.f32 %v151, %v224
    %v241 = vsub.f32 %v152, %v225
    %v242 = vsub.f32 %v153, %v226
    %v243 = vsub.f32 %v154, %v227
    %v244 = vsub.f32 %v155, %v228
    %v245 = vsub.f32 %v156, %v229
    %v246 = vmul.f32 %v230, %v230
    %v247 = vmul.f32 %v231, %v231
    %v248 = vmul.f32 %v232, %v232
    %v249 = vmul.f32 %v233, %v233
    %v250 = vmul.f32 %v234, %v234
    %v251 = vmul.f32 %v235, %v235
    %v252 = vmul.f32 %v236, %v236
    %v253 = vmul.f32 %v237, %v237
    %v254 = vmul.f32 %v238, %v238
    %v255 = vmul.f32 %v239, %v239
    %v256 = vmul.f32 %v240, %v240
    %v257 = vmul.f32 %v241, %v241
    %v258 = vmul.f32 %v242, %v242
    %v259 = vmul.f32 %v243, %v243
    %v260 = vmul.f32 %v244, %v244
    %v261 = vmul.f32 %v245, %v245
    %262 = vadd.xlane.f32.xlu0 %v246
    %v263 = vpop.xlane.xlu0 %262
    %264 = vadd.xlane.f32.xlu0 %v247
    %v265 = vpop.xlane.xlu0 %264
    %266 = vadd.xlane.f32.xlu0 %v248
    %v267 = vpop.xlane.xlu0 %266
    %268 = vadd.xlane.f32.xlu0 %v249
    %v269 = vpop.xlane.xlu0 %268
    %270 = vadd.xlane.f32.xlu0 %v250
    %v271 = vpop.xlane.xlu0 %270
    %272 = vadd.xlane.f32.xlu0 %v251
    %v273 = vpop.xlane.xlu0 %272
    %274 = vadd.xlane.f32.xlu0 %v252
    %v275 = vpop.xlane.xlu0 %274
    %276 = vadd.xlane.f32.xlu0 %v253
    %v277 = vpop.xlane.xlu0 %276
    %278 = vadd.xlane.f32.xlu0 %v254
    %v279 = vpop.xlane.xlu0 %278
    %280 = vadd.xlane.f32.xlu0 %v255
    %v281 = vpop.xlane.xlu0 %280
    %282 = vadd.xlane.f32.xlu0 %v256
    %v283 = vpop.xlane.xlu0 %282
    %284 = vadd.xlane.f32.xlu0 %v257
    %v285 = vpop.xlane.xlu0 %284
    %286 = vadd.xlane.f32.xlu0 %v258
    %v287 = vpop.xlane.xlu0 %286
    %288 = vadd.xlane.f32.xlu0 %v259
    %v289 = vpop.xlane.xlu0 %288
    %290 = vadd.xlane.f32.xlu0 %v260
    %v291 = vpop.xlane.xlu0 %290
    %292 = vadd.xlane.f32.xlu0 %v261
    %v293 = vpop.xlane.xlu0 %292
    %v294 = vmul.f32 %v263, %v213
    %v295 = vmul.f32 %v265, %v213
    %v296 = vmul.f32 %v267, %v213
    %v297 = vmul.f32 %v269, %v213
    %v298 = vmul.f32 %v271, %v213
    %v299 = vmul.f32 %v273, %v213
    %v300 = vmul.f32 %v275, %v213
    %v301 = vmul.f32 %v277, %v213
    %v302 = vmul.f32 %v279, %v213
    %v303 = vmul.f32 %v281, %v213
    %v304 = vmul.f32 %v283, %v213
    %v305 = vmul.f32 %v285, %v213
    %v306 = vmul.f32 %v287, %v213
    %v307 = vmul.f32 %v289, %v213
    %v308 = vmul.f32 %v291, %v213
    %v309 = vmul.f32 %v293, %v213
    %v310 = vadd.f32 %v294, 1e-05
    %v311 = vadd.f32 %v295, 1e-05
    %v312 = vadd.f32 %v296, 1e-05
    %v313 = vadd.f32 %v297, 1e-05
    %v314 = vadd.f32 %v298, 1e-05
    %v315 = vadd.f32 %v299, 1e-05
    %v316 = vadd.f32 %v300, 1e-05
    %v317 = vadd.f32 %v301, 1e-05
    %v318 = vadd.f32 %v302, 1e-05
    %v319 = vadd.f32 %v303, 1e-05
    %v320 = vadd.f32 %v304, 1e-05
    %v321 = vadd.f32 %v305, 1e-05
    %v322 = vadd.f32 %v306, 1e-05
    %v323 = vadd.f32 %v307, 1e-05
    %v324 = vadd.f32 %v308, 1e-05
    %v325 = vadd.f32 %v309, 1e-05
    %v326 = vrsqrt.pop %v310
    %v327 = vmul.f32 %v326, %v310
    %v328 = vmul.f32 %v327, %v326
    %v329 = vmul.f32 0.5, %v328
    %v330 = vsub.f32 1.5, %v329
    %v331 = vmul.f32 %v326, %v330
    %vm332 = vweird.f32 %v310
    %vm333 = vweird.f32 %v326
    %vm334 = vmor %vm332, %vm333
    %v335 = vsel %vm334, %v326, %v331
    %v336 = vrsqrt.pop %v311
    %v337 = vmul.f32 %v336, %v311
    %v338 = vmul.f32 %v337, %v336
    %v339 = vmul.f32 0.5, %v338
    %v340 = vsub.f32 1.5, %v339
    %v341 = vmul.f32 %v336, %v340
    %vm342 = vweird.f32 %v311
    %vm343 = vweird.f32 %v336
    %vm344 = vmor %vm342, %vm343
    %v345 = vsel %vm344, %v336, %v341
    %v346 = vrsqrt.pop %v312
    %v347 = vmul.f32 %v346, %v312
    %v348 = vmul.f32 %v347, %v346
    %v349 = vmul.f32 0.5, %v348
    %v350 = vsub.f32 1.5, %v349
    %v351 = vmul.f32 %v346, %v350
    %vm352 = vweird.f32 %v312
    %vm353 = vweird.f32 %v346
    %vm354 = vmor %vm352, %vm353
    %v355 = vsel %vm354, %v346, %v351
    %v356 = vrsqrt.pop %v313
    %v357 = vmul.f32 %v356, %v313
    %v358 = vmul.f32 %v357, %v356
    %v359 = vmul.f32 0.5, %v358
    %v360 = vsub.f32 1.5, %v359
    %v361 = vmul.f32 %v356, %v360
    %vm362 = vweird.f32 %v313
    %vm363 = vweird.f32 %v356
    %vm364 = vmor %vm362, %vm363
    %v365 = vsel %vm364, %v356, %v361
    %v366 = vrsqrt.pop %v314
    %v367 = vmul.f32 %v366, %v314
    %v368 = vmul.f32 %v367, %v366
    %v369 = vmul.f32 0.5, %v368
    %v370 = vsub.f32 1.5, %v369
    %v371 = vmul.f32 %v366, %v370
    %vm372 = vweird.f32 %v314
    %vm373 = vweird.f32 %v366
    %vm374 = vmor %vm372, %vm373
    %v375 = vsel %vm374, %v366, %v371
    %v376 = vrsqrt.pop %v315
    %v377 = vmul.f32 %v376, %v315
    %v378 = vmul.f32 %v377, %v376
    %v379 = vmul.f32 0.5, %v378
    %v380 = vsub.f32 1.5, %v379
    %v381 = vmul.f32 %v376, %v380
    %vm382 = vweird.f32 %v315
    %vm383 = vweird.f32 %v376
    %vm384 = vmor %vm382, %vm383
    %v385 = vsel %vm384, %v376, %v381
    %v386 = vrsqrt.pop %v316
    %v387 = vmul.f32 %v386, %v316
    %v388 = vmul.f32 %v387, %v386
    %v389 = vmul.f32 0.5, %v388
    %v390 = vsub.f32 1.5, %v389
    %v391 = vmul.f32 %v386, %v390
    %vm392 = vweird.f32 %v316
    %vm393 = vweird.f32 %v386
    %vm394 = vmor %vm392, %vm393
    %v395 = vsel %vm394, %v386, %v391
    %v396 = vrsqrt.pop %v317
    %v397 = vmul.f32 %v396, %v317
    %v398 = vmul.f32 %v397, %v396
    %v399 = vmul.f32 0.5, %v398
    %v400 = vsub.f32 1.5, %v399
    %v401 = vmul.f32 %v396, %v400
    %vm402 = vweird.f32 %v317
    %vm403 = vweird.f32 %v396
    %vm404 = vmor %vm402, %vm403
    %v405 = vsel %vm404, %v396, %v401
    %v406 = vrsqrt.pop %v318
    %v407 = vmul.f32 %v406, %v318
    %v408 = vmul.f32 %v407, %v406
    %v409 = vmul.f32 0.5, %v408
    %v410 = vsub.f32 1.5, %v409
    %v411 = vmul.f32 %v406, %v410
    %vm412 = vweird.f32 %v318
    %vm413 = vweird.f32 %v406
    %vm414 = vmor %vm412, %vm413
    %v415 = vsel %vm414, %v406, %v411
    %v416 = vrsqrt.pop %v319
    %v417 = vmul.f32 %v416, %v319
    %v418 = vmul.f32 %v417, %v416
    %v419 = vmul.f32 0.5, %v418
    %v420 = vsub.f32 1.5, %v419
    %v421 = vmul.f32 %v416, %v420
    %vm422 = vweird.f32 %v319
    %vm423 = vweird.f32 %v416
    %vm424 = vmor %vm422, %vm423
    %v425 = vsel %vm424, %v416, %v421
    %v426 = vrsqrt.pop %v320
    %v427 = vmul.f32 %v426, %v320
    %v428 = vmul.f32 %v427, %v426
    %v429 = vmul.f32 0.5, %v428
    %v430 = vsub.f32 1.5, %v429
    %v431 = vmul.f32 %v426, %v430
    %vm432 = vweird.f32 %v320
    %vm433 = vweird.f32 %v426
    %vm434 = vmor %vm432, %vm433
    %v435 = vsel %vm434, %v426, %v431
    %v436 = vrsqrt.pop %v321
    %v437 = vmul.f32 %v436, %v321
    %v438 = vmul.f32 %v437, %v436
    %v439 = vmul.f32 0.5, %v438
    %v440 = vsub.f32 1.5, %v439
    %v441 = vmul.f32 %v436, %v440
    %vm442 = vweird.f32 %v321
    %vm443 = vweird.f32 %v436
    %vm444 = vmor %vm442, %vm443
    %v445 = vsel %vm444, %v436, %v441
    %v446 = vrsqrt.pop %v322
    %v447 = vmul.f32 %v446, %v322
    %v448 = vmul.f32 %v447, %v446
    %v449 = vmul.f32 0.5, %v448
    %v450 = vsub.f32 1.5, %v449
    %v451 = vmul.f32 %v446, %v450
    %vm452 = vweird.f32 %v322
    %vm453 = vweird.f32 %v446
    %vm454 = vmor %vm452, %vm453
    %v455 = vsel %vm454, %v446, %v451
    %v456 = vrsqrt.pop %v323
    %v457 = vmul.f32 %v456, %v323
    %v458 = vmul.f32 %v457, %v456
    %v459 = vmul.f32 0.5, %v458
    %v460 = vsub.f32 1.5, %v459
    %v461 = vmul.f32 %v456, %v460
    %vm462 = vweird.f32 %v323
    %vm463 = vweird.f32 %v456
    %vm464 = vmor %vm462, %vm463
    %v465 = vsel %vm464, %v456, %v461
    %v466 = vrsqrt.pop %v324
    %v467 = vmul.f32 %v466, %v324
    %v468 = vmul.f32 %v467, %v466
    %v469 = vmul.f32 0.5, %v468
    %v470 = vsub.f32 1.5, %v469
    %v471 = vmul.f32 %v466, %v470
    %vm472 = vweird.f32 %v324
    %vm473 = vweird.f32 %v466
    %vm474 = vmor %vm472, %vm473
    %v475 = vsel %vm474, %v466, %v471
    %v476 = vrsqrt.pop %v325
    %v477 = vmul.f32 %v476, %v325
    %v478 = vmul.f32 %v477, %v476
    %v479 = vmul.f32 0.5, %v478
    %v480 = vsub.f32 1.5, %v479
    %v481 = vmul.f32 %v476, %v480
    %vm482 = vweird.f32 %v325
    %vm483 = vweird.f32 %v476
    %vm484 = vmor %vm482, %vm483
    %v485 = vsel %vm484, %v476, %v481
    %v486 = vmul.f32 %v230, %v335
    %v487 = vmul.f32 %v231, %v345
    %v488 = vmul.f32 %v232, %v355
    %v489 = vmul.f32 %v233, %v365
    %v490 = vmul.f32 %v234, %v375
    %v491 = vmul.f32 %v235, %v385
    %v492 = vmul.f32 %v236, %v395
    %v493 = vmul.f32 %v237, %v405
    %v494 = vmul.f32 %v238, %v415
    %v495 = vmul.f32 %v239, %v425
    %v496 = vmul.f32 %v240, %v435
    %v497 = vmul.f32 %v241, %v445
    %v498 = vmul.f32 %v242, %v455
    %v499 = vmul.f32 %v243, %v465
    %v500 = vmul.f32 %v244, %v475
    %v501 = vmul.f32 %v245, %v485
    %v503 = vperm.slane %v173, 0
    %v505 = vmul.f32 %v486, %v503
    %v506 = vmul.f32 %v487, %v503
    %v507 = vmul.f32 %v488, %v503
    %v508 = vmul.f32 %v489, %v503
    %v509 = vmul.f32 %v490, %v503
    %v510 = vmul.f32 %v491, %v503
    %v511 = vmul.f32 %v492, %v503
    %v512 = vmul.f32 %v493, %v503
    %v513 = vmul.f32 %v494, %v503
    %v514 = vmul.f32 %v495, %v503
    %v515 = vmul.f32 %v496, %v503
    %v516 = vmul.f32 %v497, %v503
    %v517 = vmul.f32 %v498, %v503
    %v518 = vmul.f32 %v499, %v503
    %v519 = vmul.f32 %v500, %v503
    %v520 = vmul.f32 %v501, %v503
    %v522 = vperm.slane %v174, 0
    %v524 = vadd.f32 %v505, %v522
    %v525 = vadd.f32 %v506, %v522
    %v526 = vadd.f32 %v507, %v522
    %v527 = vadd.f32 %v508, %v522
    %v528 = vadd.f32 %v509, %v522
    %v529 = vadd.f32 %v510, %v522
    %v530 = vadd.f32 %v511, %v522
    %v531 = vadd.f32 %v512, %v522
    %v532 = vadd.f32 %v513, %v522
    %v533 = vadd.f32 %v514, %v522
    %v534 = vadd.f32 %v515, %v522
    %v535 = vadd.f32 %v516, %v522
    %v536 = vadd.f32 %v517, %v522
    %v537 = vadd.f32 %v518, %v522
    %v538 = vadd.f32 %v519, %v522
    %v539 = vadd.f32 %v520, %v522
    %v540 = vld [vmem:[#allocation10] sm:$0xff]
    %v541 = vld [vmem:[#allocation10 + $0x8] sm:$0xff]
    %v542 = vld [vmem:[#allocation10 + $0x10] sm:$0xff]
    %v543 = vld [vmem:[#allocation10 + $0x18] sm:$0xff]
    %v544 = vld [vmem:[#allocation10 + $0x20] sm:$0xff]
    %v545 = vld [vmem:[#allocation10 + $0x28] sm:$0xff]
    %v546 = vld [vmem:[#allocation10 + $0x30] sm:$0xff]
    %v547 = vld [vmem:[#allocation10 + $0x38] sm:$0xff]
    %v548 = vld [vmem:[#allocation10 + $0x40] sm:$0xff]
    %v549 = vld [vmem:[#allocation10 + $0x48] sm:$0xff]
    %v550 = vld [vmem:[#allocation10 + $0x50] sm:$0xff]
    %v551 = vld [vmem:[#allocation10 + $0x58] sm:$0xff]
    %v552 = vld [vmem:[#allocation10 + $0x60] sm:$0xff]
    %v553 = vld [vmem:[#allocation10 + $0x68] sm:$0xff]
    %v554 = vld [vmem:[#allocation10 + $0x70] sm:$0xff]
    %v555 = vld [vmem:[#allocation10 + $0x78] sm:$0xff]
    %v556 = vld [vmem:[#allocation10 + $0x80] sm:$0xff]
    %v557 = vld [vmem:[#allocation10 + $0x88] sm:$0xff]
    %v558 = vld [vmem:[#allocation10 + $0x90] sm:$0xff]
    %v559 = vld [vmem:[#allocation10 + $0x98] sm:$0xff]
    %v560 = vld [vmem:[#allocation10 + $0xa0] sm:$0xff]
    %v561 = vld [vmem:[#allocation10 + $0xa8] sm:$0xff]
    %v562 = vld [vmem:[#allocation10 + $0xb0] sm:$0xff]
    %v563 = vld [vmem:[#allocation10 + $0xb8] sm:$0xff]
    %v564 = vld [vmem:[#allocation10 + $0xc0] sm:$0xff]
    %v565 = vld [vmem:[#allocation10 + $0xc8] sm:$0xff]
    %v566 = vld [vmem:[#allocation10 + $0xd0] sm:$0xff]
    %v567 = vld [vmem:[#allocation10 + $0xd8] sm:$0xff]
    %v568 = vld [vmem:[#allocation10 + $0xe0] sm:$0xff]
    %v569 = vld [vmem:[#allocation10 + $0xe8] sm:$0xff]
    %v570 = vld [vmem:[#allocation10 + $0xf0] sm:$0xff]
    %v571 = vld [vmem:[#allocation10 + $0xf8] sm:$0xff]
    %v572 = vld [vmem:[#allocation10 + $0x100] sm:$0xff]
    %v573 = vld [vmem:[#allocation10 + $0x108] sm:$0xff]
    %v574 = vld [vmem:[#allocation10 + $0x110] sm:$0xff]
    %v575 = vld [vmem:[#allocation10 + $0x118] sm:$0xff]
    %v576 = vld [vmem:[#allocation10 + $0x120] sm:$0xff]
    %v577 = vld [vmem:[#allocation10 + $0x128] sm:$0xff]
    %v578 = vld [vmem:[#allocation10 + $0x130] sm:$0xff]
    %v579 = vld [vmem:[#allocation10 + $0x138] sm:$0xff]
    %v580 = vld [vmem:[#allocation10 + $0x140] sm:$0xff]
    %v581 = vld [vmem:[#allocation10 + $0x148] sm:$0xff]
    %v582 = vld [vmem:[#allocation10 + $0x150] sm:$0xff]
    %v583 = vld [vmem:[#allocation10 + $0x158] sm:$0xff]
    %v584 = vld [vmem:[#allocation10 + $0x160] sm:$0xff]
    %v585 = vld [vmem:[#allocation10 + $0x168] sm:$0xff]
    %v586 = vld [vmem:[#allocation10 + $0x170] sm:$0xff]
    %v587 = vld [vmem:[#allocation10 + $0x178] sm:$0xff]
    %v588 = vld [vmem:[%s5] sm:$0x7]
    %v590 = vperm.slane %v588, 0
    %v591 = vperm.slane %v588, 1
    %v592 = vperm.slane %v588, 2
    %596 = vmatpush.msra.mxu0 %v585
    %597 = vmatpush.msra.mxu0 %v582
    %598 = vmatpush.msra.mxu0 %v579
    %599 = vmatpush.msra.mxu0 %v576
    %600 = vmatpush.msra.mxu0 %v573
    %601 = vmatpush.msra.mxu0 %v570
    %602 = vmatpush.msra.mxu0 %v567
    %603 = vmatpush.msra.mxu0 %v564
    %604 = vmatpush.msra.mxu0 %v561
    %605 = vmatpush.msra.mxu0 %v558
    %606 = vmatpush.msra.mxu0 %v555
    %607 = vmatpush.msra.mxu0 %v552
    %608 = vmatpush.msra.mxu0 %v549
    %609 = vmatpush.msra.mxu0 %v546
    %610 = vmatpush.msra.mxu0 %v543
    %611 = vmatpush.msra.mxu0 %v540
    %612 = vmatmul.f32.gmra.mxu0 %v524
    %v613 = vpop.f32.mrf.mxu0
    %v614 = vadd.f32 %v590, %v613
    %615 = vmatmul.f32.gmra.mxu0 %v525
    %v616 = vpop.f32.mrf.mxu0
    %v617 = vadd.f32 %v590, %v616
    %618 = vmatmul.f32.gmra.mxu0 %v526
    %v619 = vpop.f32.mrf.mxu0
    %v620 = vadd.f32 %v590, %v619
    %621 = vmatmul.f32.gmra.mxu0 %v527
    %v622 = vpop.f32.mrf.mxu0
    %v623 = vadd.f32 %v590, %v622
    %624 = vmatmul.f32.gmra.mxu0 %v528
    %v625 = vpop.f32.mrf.mxu0
    %v626 = vadd.f32 %v590, %v625
    %627 = vmatmul.f32.gmra.mxu0 %v529
    %v628 = vpop.f32.mrf.mxu0
    %v629 = vadd.f32 %v590, %v628
    %630 = vmatmul.f32.gmra.mxu0 %v530
    %v631 = vpop.f32.mrf.mxu0
    %v632 = vadd.f32 %v590, %v631
    %633 = vmatmul.f32.gmra.mxu0 %v531
    %v634 = vpop.f32.mrf.mxu0
    %v635 = vadd.f32 %v590, %v634
    %636 = vmatmul.f32.gmra.mxu0 %v532
    %v637 = vpop.f32.mrf.mxu0
    %v638 = vadd.f32 %v590, %v637
    %639 = vmatmul.f32.gmra.mxu0 %v533
    %v640 = vpop.f32.mrf.mxu0
    %v641 = vadd.f32 %v590, %v640
    %642 = vmatmul.f32.gmra.mxu0 %v534
    %v643 = vpop.f32.mrf.mxu0
    %v644 = vadd.f32 %v590, %v643
    %645 = vmatmul.f32.gmra.mxu0 %v535
    %v646 = vpop.f32.mrf.mxu0
    %v647 = vadd.f32 %v590, %v646
    %648 = vmatmul.f32.gmra.mxu0 %v536
    %v649 = vpop.f32.mrf.mxu0
    %v650 = vadd.f32 %v590, %v649
    %651 = vmatmul.f32.gmra.mxu0 %v537
    %v652 = vpop.f32.mrf.mxu0
    %v653 = vadd.f32 %v590, %v652
    %654 = vmatmul.f32.gmra.mxu0 %v538
    %v655 = vpop.f32.mrf.mxu0
    %v656 = vadd.f32 %v590, %v655
    %657 = vmatmul.f32.gmra.mxu0 %v539
    %v658 = vpop.f32.mrf.mxu0
    %v659 = vadd.f32 %v590, %v658
    %660 = vdwg.mxu0
    %661 = vmatpush.msra.mxu0 %v586
    %662 = vmatpush.msra.mxu0 %v583
    %663 = vmatpush.msra.mxu0 %v580
    %664 = vmatpush.msra.mxu0 %v577
    %665 = vmatpush.msra.mxu0 %v574
    %666 = vmatpush.msra.mxu0 %v571
    %667 = vmatpush.msra.mxu0 %v568
    %668 = vmatpush.msra.mxu0 %v565
    %669 = vmatpush.msra.mxu0 %v562
    %670 = vmatpush.msra.mxu0 %v559
    %671 = vmatpush.msra.mxu0 %v556
    %672 = vmatpush.msra.mxu0 %v553
    %673 = vmatpush.msra.mxu0 %v550
    %674 = vmatpush.msra.mxu0 %v547
    %675 = vmatpush.msra.mxu0 %v544
    %676 = vmatpush.msra.mxu0 %v541
    %677 = vmatmul.f32.gmra.mxu0 %v524
    %v678 = vpop.f32.mrf.mxu0
    %v679 = vadd.f32 %v591, %v678
    %680 = vmatmul.f32.gmra.mxu0 %v525
    %v681 = vpop.f32.mrf.mxu0
    %v682 = vadd.f32 %v591, %v681
    %683 = vmatmul.f32.gmra.mxu0 %v526
    %v684 = vpop.f32.mrf.mxu0
    %v685 = vadd.f32 %v591, %v684
    %686 = vmatmul.f32.gmra.mxu0 %v527
    %v687 = vpop.f32.mrf.mxu0
    %v688 = vadd.f32 %v591, %v687
    %689 = vmatmul.f32.gmra.mxu0 %v528
    %v690 = vpop.f32.mrf.mxu0
    %v691 = vadd.f32 %v591, %v690
    %692 = vmatmul.f32.gmra.mxu0 %v529
    %v693 = vpop.f32.mrf.mxu0
    %v694 = vadd.f32 %v591, %v693
    %695 = vmatmul.f32.gmra.mxu0 %v530
    %v696 = vpop.f32.mrf.mxu0
    %v697 = vadd.f32 %v591, %v696
    %698 = vmatmul.f32.gmra.mxu0 %v531
    %v699 = vpop.f32.mrf.mxu0
    %v700 = vadd.f32 %v591, %v699
    %701 = vmatmul.f32.gmra.mxu0 %v532
    %v702 = vpop.f32.mrf.mxu0
    %v703 = vadd.f32 %v591, %v702
    %704 = vmatmul.f32.gmra.mxu0 %v533
    %v705 = vpop.f32.mrf.mxu0
    %v706 = vadd.f32 %v591, %v705
    %707 = vmatmul.f32.gmra.mxu0 %v534
    %v708 = vpop.f32.mrf.mxu0
    %v709 = vadd.f32 %v591, %v708
    %710 = vmatmul.f32.gmra.mxu0 %v535
    %v711 = vpop.f32.mrf.mxu0
    %v712 = vadd.f32 %v591, %v711
    %713 = vmatmul.f32.gmra.mxu0 %v536
    %v714 = vpop.f32.mrf.mxu0
    %v715 = vadd.f32 %v591, %v714
    %716 = vmatmul.f32.gmra.mxu0 %v537
    %v717 = vpop.f32.mrf.mxu0
    %v718 = vadd.f32 %v591, %v717
    %719 = vmatmul.f32.gmra.mxu0 %v538
    %v720 = vpop.f32.mrf.mxu0
    %v721 = vadd.f32 %v591, %v720
    %722 = vmatmul.f32.gmra.mxu0 %v539
    %v723 = vpop.f32.mrf.mxu0
    %v724 = vadd.f32 %v591, %v723
    %725 = vdwg.mxu0
    %726 = vmatpush.msra.mxu0 %v587
    %727 = vmatpush.msra.mxu0 %v584
    %728 = vmatpush.msra.mxu0 %v581
    %729 = vmatpush.msra.mxu0 %v578
    %730 = vmatpush.msra.mxu0 %v575
    %731 = vmatpush.msra.mxu0 %v572
    %732 = vmatpush.msra.mxu0 %v569
    %733 = vmatpush.msra.mxu0 %v566
    %734 = vmatpush.msra.mxu0 %v563
    %735 = vmatpush.msra.mxu0 %v560
    %736 = vmatpush.msra.mxu0 %v557
    %737 = vmatpush.msra.mxu0 %v554
    %738 = vmatpush.msra.mxu0 %v551
    %739 = vmatpush.msra.mxu0 %v548
    %740 = vmatpush.msra.mxu0 %v545
    %741 = vmatpush.msra.mxu0 %v542
    %742 = vmatmul.f32.gmra.mxu0 %v524
    %v743 = vpop.f32.mrf.mxu0
    %v744 = vadd.f32 %v592, %v743
    %745 = vmatmul.f32.gmra.mxu0 %v525
    %v746 = vpop.f32.mrf.mxu0
    %v747 = vadd.f32 %v592, %v746
    %748 = vmatmul.f32.gmra.mxu0 %v526
    %v749 = vpop.f32.mrf.mxu0
    %v750 = vadd.f32 %v592, %v749
    %751 = vmatmul.f32.gmra.mxu0 %v527
    %v752 = vpop.f32.mrf.mxu0
    %v753 = vadd.f32 %v592, %v752
    %754 = vmatmul.f32.gmra.mxu0 %v528
    %v755 = vpop.f32.mrf.mxu0
    %v756 = vadd.f32 %v592, %v755
    %757 = vmatmul.f32.gmra.mxu0 %v529
    %v758 = vpop.f32.mrf.mxu0
    %v759 = vadd.f32 %v592, %v758
    %760 = vmatmul.f32.gmra.mxu0 %v530
    %v761 = vpop.f32.mrf.mxu0
    %v762 = vadd.f32 %v592, %v761
    %763 = vmatmul.f32.gmra.mxu0 %v531
    %v764 = vpop.f32.mrf.mxu0
    %v765 = vadd.f32 %v592, %v764
    %766 = vmatmul.f32.gmra.mxu0 %v532
    %v767 = vpop.f32.mrf.mxu0
    %v768 = vadd.f32 %v592, %v767
    %769 = vmatmul.f32.gmra.mxu0 %v533
    %v770 = vpop.f32.mrf.mxu0
    %v771 = vadd.f32 %v592, %v770
    %772 = vmatmul.f32.gmra.mxu0 %v534
    %v773 = vpop.f32.mrf.mxu0
    %v774 = vadd.f32 %v592, %v773
    %775 = vmatmul.f32.gmra.mxu0 %v535
    %v776 = vpop.f32.mrf.mxu0
    %v777 = vadd.f32 %v592, %v776
    %778 = vmatmul.f32.gmra.mxu0 %v536
    %v779 = vpop.f32.mrf.mxu0
    %v780 = vadd.f32 %v592, %v779
    %781 = vmatmul.f32.gmra.mxu0 %v537
    %v782 = vpop.f32.mrf.mxu0
    %v783 = vadd.f32 %v592, %v782
    %784 = vmatmul.f32.gmra.mxu0 %v538
    %v785 = vpop.f32.mrf.mxu0
    %v786 = vadd.f32 %v592, %v785
    %787 = vmatmul.f32.gmra.mxu0 %v539
    %v788 = vpop.f32.mrf.mxu0
    %v789 = vadd.f32 %v592, %v788
    %790 = vdwg.mxu0
    %791 = vxpose.xlu0.b32.start [1/16] %v679, 128
    %792 = vxpose.xlu0.b32.cont [2/16] %v682, 128
    %793 = vxpose.xlu0.b32.cont [3/16] %v685, 128
    %794 = vxpose.xlu0.b32.cont [4/16] %v688, 128
    %795 = vxpose.xlu0.b32.cont [5/16] %v691, 128
    %796 = vxpose.xlu0.b32.cont [6/16] %v694, 128
    %797 = vxpose.xlu0.b32.cont [7/16] %v697, 128
    %798 = vxpose.xlu0.b32.cont [8/16] %v700, 128
    %799 = vxpose.xlu0.b32.cont [9/16] 0.0, 128
    %800 = vxpose.xlu0.b32.cont [10/16] 0.0, 128
    %801 = vxpose.xlu0.b32.cont [11/16] 0.0, 128
    %802 = vxpose.xlu0.b32.cont [12/16] 0.0, 128
    %803 = vxpose.xlu0.b32.cont [13/16] 0.0, 128
    %804 = vxpose.xlu0.b32.cont [14/16] 0.0, 128
    %805 = vxpose.xlu0.b32.cont [15/16] 0.0, 128
    %806 = vxpose.xlu0.b32.end [16/16] 0.0, 128
    %v807 = vpop.trf.xlu0
    %v808 = vpop.trf.xlu0
    %v809 = vpop.trf.xlu0
    %v810 = vpop.trf.xlu0
    %v811 = vpop.trf.xlu0
    %v812 = vpop.trf.xlu0
    %v813 = vpop.trf.xlu0
    %v814 = vpop.trf.xlu0
    %v815 = vpop.trf.xlu0
    %v816 = vpop.trf.xlu0
    %v817 = vpop.trf.xlu0
    %v818 = vpop.trf.xlu0
    %v819 = vpop.trf.xlu0
    %v820 = vpop.trf.xlu0
    %v821 = vpop.trf.xlu0
    %v822 = vpop.trf.xlu0
    %vm823 = vcmask 523264
    %v825 = vsel %vm823, %v807, 0
    %v828 = vsel %vm823, %v808, 0
    %v831 = vsel %vm823, %v809, 0
    %v834 = vsel %vm823, %v810, 0
    %v837 = vsel %vm823, %v811, 0
    %v840 = vsel %vm823, %v812, 0
    %v843 = vsel %vm823, %v813, 0
    %v846 = vsel %vm823, %v814, 0
    %v849 = vsel %vm823, %v815, 0
    %v852 = vsel %vm823, %v816, 0
    %v855 = vsel %vm823, %v817, 0
    %v858 = vsel %vm823, %v818, 0
    %v861 = vsel %vm823, %v819, 0
    %v864 = vsel %vm823, %v820, 0
    %v867 = vsel %vm823, %v821, 0
    %v870 = vsel %vm823, %v822, 0
    %872 = vmatpush.msra.mxu0 0.0
    %873 = vmatpush.msra.mxu0 0.0
    %874 = vmatpush.msra.mxu0 0.0
    %875 = vmatpush.msra.mxu0 0.0
    %876 = vmatpush.msra.mxu0 0.0
    %877 = vmatpush.msra.mxu0 0.0
    %878 = vmatpush.msra.mxu0 0.0
    %879 = vmatpush.msra.mxu0 0.0
    %880 = vmatpush.msra.mxu0 %v765
    %881 = vmatpush.msra.mxu0 %v762
    %882 = vmatpush.msra.mxu0 %v759
    %883 = vmatpush.msra.mxu0 %v756
    %884 = vmatpush.msra.mxu0 %v753
    %885 = vmatpush.msra.mxu0 %v750
    %886 = vmatpush.msra.mxu0 %v747
    %887 = vmatpush.msra.mxu0 %v744
    %888 = vmatmul.f32.gmra.mxu0 %v825
    %v889 = vpop.f32.mrf.mxu0
    %v890 = vadd.f32 0.0, %v889
    %891 = vmatmul.f32.gmra.mxu0 %v828
    %v892 = vpop.f32.mrf.mxu0
    %v893 = vadd.f32 0.0, %v892
    %894 = vmatmul.f32.gmra.mxu0 %v831
    %v895 = vpop.f32.mrf.mxu0
    %v896 = vadd.f32 0.0, %v895
    %897 = vmatmul.f32.gmra.mxu0 %v834
    %v898 = vpop.f32.mrf.mxu0
    %v899 = vadd.f32 0.0, %v898
    %900 = vmatmul.f32.gmra.mxu0 %v837
    %v901 = vpop.f32.mrf.mxu0
    %v902 = vadd.f32 0.0, %v901
    %903 = vmatmul.f32.gmra.mxu0 %v840
    %v904 = vpop.f32.mrf.mxu0
    %v905 = vadd.f32 0.0, %v904
    %906 = vmatmul.f32.gmra.mxu0 %v843
    %v907 = vpop.f32.mrf.mxu0
    %v908 = vadd.f32 0.0, %v907
    %909 = vmatmul.f32.gmra.mxu0 %v846
    %v910 = vpop.f32.mrf.mxu0
    %v911 = vadd.f32 0.0, %v910
    %912 = vmatmul.f32.gmra.mxu0 %v849
    %v913 = vpop.f32.mrf.mxu0
    %v914 = vadd.f32 0.0, %v913
    %915 = vmatmul.f32.gmra.mxu0 %v852
    %v916 = vpop.f32.mrf.mxu0
    %v917 = vadd.f32 0.0, %v916
    %918 = vmatmul.f32.gmra.mxu0 %v855
    %v919 = vpop.f32.mrf.mxu0
    %v920 = vadd.f32 0.0, %v919
    %921 = vmatmul.f32.gmra.mxu0 %v858
    %v922 = vpop.f32.mrf.mxu0
    %v923 = vadd.f32 0.0, %v922
    %924 = vmatmul.f32.gmra.mxu0 %v861
    %v925 = vpop.f32.mrf.mxu0
    %v926 = vadd.f32 0.0, %v925
    %927 = vmatmul.f32.gmra.mxu0 %v864
    %v928 = vpop.f32.mrf.mxu0
    %v929 = vadd.f32 0.0, %v928
    %930 = vmatmul.f32.gmra.mxu0 %v867
    %v931 = vpop.f32.mrf.mxu0
    %v932 = vadd.f32 0.0, %v931
    %933 = vmatmul.f32.gmra.mxu0 %v870
    %v934 = vpop.f32.mrf.mxu0
    %v935 = vadd.f32 0.0, %v934
    %936 = vdwg.mxu0
    %v937 = vrcp.pop 64.0
    %v938 = vmul.f32 64.0, %v937
    %v939 = vsub.f32 1.0, %v938
    %v940 = vmul.f32 %v937, %v939
    %v941 = vadd.f32 %v937, %v940
    %vm942 = vweird.f32 %v937
    %v943 = vsel %vm942, %v937, %v941
    %v944 = vmul.f32 %v890, %v943
    %v945 = vmul.f32 %v893, %v943
    %v946 = vmul.f32 %v896, %v943
    %v947 = vmul.f32 %v899, %v943
    %v948 = vmul.f32 %v902, %v943
    %v949 = vmul.f32 %v905, %v943
    %v950 = vmul.f32 %v908, %v943
    %v951 = vmul.f32 %v911, %v943
    %v952 = vmul.f32 %v914, %v943
    %v953 = vmul.f32 %v917, %v943
    %v954 = vmul.f32 %v920, %v943
    %v955 = vmul.f32 %v923, %v943
    %v956 = vmul.f32 %v926, %v943
    %v957 = vmul.f32 %v929, %v943
    %v958 = vmul.f32 %v932, %v943
    %v959 = vmul.f32 %v935, %v943
    %v960 = vmul.f32 %v944, %v157
    %v961 = vmul.f32 %v945, %v158
    %v962 = vmul.f32 %v946, %v159
    %v963 = vmul.f32 %v947, %v160
    %v964 = vmul.f32 %v948, %v161
    %v965 = vmul.f32 %v949, %v162
    %v966 = vmul.f32 %v950, %v163
    %v967 = vmul.f32 %v951, %v164
    %v968 = vmul.f32 %v952, %v165
    %v969 = vmul.f32 %v953, %v166
    %v970 = vmul.f32 %v954, %v167
    %v971 = vmul.f32 %v955, %v168
    %v972 = vmul.f32 %v956, %v169
    %v973 = vmul.f32 %v957, %v170
    %v974 = vmul.f32 %v958, %v171
    %v975 = vmul.f32 %v959, %v172
    %976 = vmatpush.msra.mxu0 %v975
    %977 = vmatpush.msra.mxu0 %v974
    %978 = vmatpush.msra.mxu0 %v973
    %979 = vmatpush.msra.mxu0 %v972
    %980 = vmatpush.msra.mxu0 %v971
    %981 = vmatpush.msra.mxu0 %v970
    %982 = vmatpush.msra.mxu0 %v969
    %983 = vmatpush.msra.mxu0 %v968
    %984 = vmatpush.msra.mxu0 %v967
    %985 = vmatpush.msra.mxu0 %v966
    %986 = vmatpush.msra.mxu0 %v965
    %987 = vmatpush.msra.mxu0 %v964
    %988 = vmatpush.msra.mxu0 %v963
    %989 = vmatpush.msra.mxu0 %v962
    %990 = vmatpush.msra.mxu0 %v961
    %991 = vmatpush.msra.mxu0 %v960
    %992 = vmatmul.f32.gmra.mxu0 %v614
    %v993 = vpop.f32.mrf.mxu0
    %v994 = vadd.f32 0.0, %v993
    %995 = vmatmul.f32.gmra.mxu0 %v617
    %v996 = vpop.f32.mrf.mxu0
    %v997 = vadd.f32 0.0, %v996
    %998 = vmatmul.f32.gmra.mxu0 %v620
    %v999 = vpop.f32.mrf.mxu0
    %v1000 = vadd.f32 0.0, %v999
    %1001 = vmatmul.f32.gmra.mxu0 %v623
    %v1002 = vpop.f32.mrf.mxu0
    %v1003 = vadd.f32 0.0, %v1002
    %1004 = vmatmul.f32.gmra.mxu0 %v626
    %v1005 = vpop.f32.mrf.mxu0
    %v1006 = vadd.f32 0.0, %v1005
    %1007 = vmatmul.f32.gmra.mxu0 %v629
    %v1008 = vpop.f32.mrf.mxu0
    %v1009 = vadd.f32 0.0, %v1008
    %1010 = vmatmul.f32.gmra.mxu0 %v632
    %v1011 = vpop.f32.mrf.mxu0
    %v1012 = vadd.f32 0.0, %v1011
    %1013 = vmatmul.f32.gmra.mxu0 %v635
    %v1014 = vpop.f32.mrf.mxu0
    %v1015 = vadd.f32 0.0, %v1014
    %1016 = vdwg.mxu0
    %1017 = vxpose.xlu0.b32.start [1/16] %v703, 128
    %1018 = vxpose.xlu0.b32.cont [2/16] %v706, 128
    %1019 = vxpose.xlu0.b32.cont [3/16] %v709, 128
    %1020 = vxpose.xlu0.b32.cont [4/16] %v712, 128
    %1021 = vxpose.xlu0.b32.cont [5/16] %v715, 128
    %1022 = vxpose.xlu0.b32.cont [6/16] %v718, 128
    %1023 = vxpose.xlu0.b32.cont [7/16] %v721, 128
    %1024 = vxpose.xlu0.b32.cont [8/16] %v724, 128
    %1025 = vxpose.xlu0.b32.cont [9/16] 0.0, 128
    %1026 = vxpose.xlu0.b32.cont [10/16] 0.0, 128
    %1027 = vxpose.xlu0.b32.cont [11/16] 0.0, 128
    %1028 = vxpose.xlu0.b32.cont [12/16] 0.0, 128
    %1029 = vxpose.xlu0.b32.cont [13/16] 0.0, 128
    %1030 = vxpose.xlu0.b32.cont [14/16] 0.0, 128
    %1031 = vxpose.xlu0.b32.cont [15/16] 0.0, 128
    %1032 = vxpose.xlu0.b32.end [16/16] 0.0, 128
    %v1033 = vpop.trf.xlu0
    %v1034 = vpop.trf.xlu0
    %v1035 = vpop.trf.xlu0
    %v1036 = vpop.trf.xlu0
    %v1037 = vpop.trf.xlu0
    %v1038 = vpop.trf.xlu0
    %v1039 = vpop.trf.xlu0
    %v1040 = vpop.trf.xlu0
    %v1041 = vpop.trf.xlu0
    %v1042 = vpop.trf.xlu0
    %v1043 = vpop.trf.xlu0
    %v1044 = vpop.trf.xlu0
    %v1045 = vpop.trf.xlu0
    %v1046 = vpop.trf.xlu0
    %v1047 = vpop.trf.xlu0
    %v1048 = vpop.trf.xlu0
    %v1050 = vsel %vm823, %v1033, 0
    %v1053 = vsel %vm823, %v1034, 0
    %v1056 = vsel %vm823, %v1035, 0
    %v1059 = vsel %vm823, %v1036, 0
    %v1062 = vsel %vm823, %v1037, 0
    %v1065 = vsel %vm823, %v1038, 0
    %v1068 = vsel %vm823, %v1039, 0
    %v1071 = vsel %vm823, %v1040, 0
    %v1074 = vsel %vm823, %v1041, 0
    %v1077 = vsel %vm823, %v1042, 0
    %v1080 = vsel %vm823, %v1043, 0
    %v1083 = vsel %vm823, %v1044, 0
    %v1086 = vsel %vm823, %v1045, 0
    %v1089 = vsel %vm823, %v1046, 0
    %v1092 = vsel %vm823, %v1047, 0
    %v1095 = vsel %vm823, %v1048, 0
    %1097 = vmatpush.msra.mxu0 0.0
    %1098 = vmatpush.msra.mxu0 0.0
    %1099 = vmatpush.msra.mxu0 0.0
    %1100 = vmatpush.msra.mxu0 0.0
    %1101 = vmatpush.msra.mxu0 0.0
    %1102 = vmatpush.msra.mxu0 0.0
    %1103 = vmatpush.msra.mxu0 0.0
    %1104 = vmatpush.msra.mxu0 0.0
    %1105 = vmatpush.msra.mxu0 %v789
    %1106 = vmatpush.msra.mxu0 %v786
    %1107 = vmatpush.msra.mxu0 %v783
    %1108 = vmatpush.msra.mxu0 %v780
    %1109 = vmatpush.msra.mxu0 %v777
    %1110 = vmatpush.msra.mxu0 %v774
    %1111 = vmatpush.msra.mxu0 %v771
    %1112 = vmatpush.msra.mxu0 %v768
    %1113 = vmatmul.f32.gmra.mxu0 %v1050
    %v1114 = vpop.f32.mrf.mxu0
    %v1115 = vadd.f32 0.0, %v1114
    %1116 = vmatmul.f32.gmra.mxu0 %v1053
    %v1117 = vpop.f32.mrf.mxu0
    %v1118 = vadd.f32 0.0, %v1117
    %1119 = vmatmul.f32.gmra.mxu0 %v1056
    %v1120 = vpop.f32.mrf.mxu0
    %v1121 = vadd.f32 0.0, %v1120
    %1122 = vmatmul.f32.gmra.mxu0 %v1059
    %v1123 = vpop.f32.mrf.mxu0
    %v1124 = vadd.f32 0.0, %v1123
    %1125 = vmatmul.f32.gmra.mxu0 %v1062
    %v1126 = vpop.f32.mrf.mxu0
    %v1127 = vadd.f32 0.0, %v1126
    %1128 = vmatmul.f32.gmra.mxu0 %v1065
    %v1129 = vpop.f32.mrf.mxu0
    %v1130 = vadd.f32 0.0, %v1129
    %1131 = vmatmul.f32.gmra.mxu0 %v1068
    %v1132 = vpop.f32.mrf.mxu0
    %v1133 = vadd.f32 0.0, %v1132
    %1134 = vmatmul.f32.gmra.mxu0 %v1071
    %v1135 = vpop.f32.mrf.mxu0
    %v1136 = vadd.f32 0.0, %v1135
    %1137 = vmatmul.f32.gmra.mxu0 %v1074
    %v1138 = vpop.f32.mrf.mxu0
    %v1139 = vadd.f32 0.0, %v1138
    %1140 = vmatmul.f32.gmra.mxu0 %v1077
    %v1141 = vpop.f32.mrf.mxu0
    %v1142 = vadd.f32 0.0, %v1141
    %1143 = vmatmul.f32.gmra.mxu0 %v1080
    %v1144 = vpop.f32.mrf.mxu0
    %v1145 = vadd.f32 0.0, %v1144
    %1146 = vmatmul.f32.gmra.mxu0 %v1083
    %v1147 = vpop.f32.mrf.mxu0
    %v1148 = vadd.f32 0.0, %v1147
    %1149 = vmatmul.f32.gmra.mxu0 %v1086
    %v1150 = vpop.f32.mrf.mxu0
    %v1151 = vadd.f32 0.0, %v1150
    %1152 = vmatmul.f32.gmra.mxu0 %v1089
    %v1153 = vpop.f32.mrf.mxu0
    %v1154 = vadd.f32 0.0, %v1153
    %1155 = vmatmul.f32.gmra.mxu0 %v1092
    %v1156 = vpop.f32.mrf.mxu0
    %v1157 = vadd.f32 0.0, %v1156
    %1158 = vmatmul.f32.gmra.mxu0 %v1095
    %v1159 = vpop.f32.mrf.mxu0
    %v1160 = vadd.f32 0.0, %v1159
    %1161 = vdwg.mxu0
    %v1162 = vmul.f32 %v1115, %v943
    %v1163 = vmul.f32 %v1118, %v943
    %v1164 = vmul.f32 %v1121, %v943
    %v1165 = vmul.f32 %v1124, %v943
    %v1166 = vmul.f32 %v1127, %v943
    %v1167 = vmul.f32 %v1130, %v943
    %v1168 = vmul.f32 %v1133, %v943
    %v1169 = vmul.f32 %v1136, %v943
    %v1170 = vmul.f32 %v1139, %v943
    %v1171 = vmul.f32 %v1142, %v943
    %v1172 = vmul.f32 %v1145, %v943
    %v1173 = vmul.f32 %v1148, %v943
    %v1174 = vmul.f32 %v1151, %v943
    %v1175 = vmul.f32 %v1154, %v943
    %v1176 = vmul.f32 %v1157, %v943
    %v1177 = vmul.f32 %v1160, %v943
    %v1178 = vmul.f32 %v1162, %v157
    %v1179 = vmul.f32 %v1163, %v158
    %v1180 = vmul.f32 %v1164, %v159
    %v1181 = vmul.f32 %v1165, %v160
    %v1182 = vmul.f32 %v1166, %v161
    %v1183 = vmul.f32 %v1167, %v162
    %v1184 = vmul.f32 %v1168, %v163
    %v1185 = vmul.f32 %v1169, %v164
    %v1186 = vmul.f32 %v1170, %v165
    %v1187 = vmul.f32 %v1171, %v166
    %v1188 = vmul.f32 %v1172, %v167
    %v1189 = vmul.f32 %v1173, %v168
    %v1190 = vmul.f32 %v1174, %v169
    %v1191 = vmul.f32 %v1175, %v170
    %v1192 = vmul.f32 %v1176, %v171
    %v1193 = vmul.f32 %v1177, %v172
    %1194 = vmatpush.msra.mxu0 %v1193
    %1195 = vmatpush.msra.mxu0 %v1192
    %1196 = vmatpush.msra.mxu0 %v1191
    %1197 = vmatpush.msra.mxu0 %v1190
    %1198 = vmatpush.msra.mxu0 %v1189
    %1199 = vmatpush.msra.mxu0 %v1188
    %1200 = vmatpush.msra.mxu0 %v1187
    %1201 = vmatpush.msra.mxu0 %v1186
    %1202 = vmatpush.msra.mxu0 %v1185
    %1203 = vmatpush.msra.mxu0 %v1184
    %1204 = vmatpush.msra.mxu0 %v1183
    %1205 = vmatpush.msra.mxu0 %v1182
    %1206 = vmatpush.msra.mxu0 %v1181
    %1207 = vmatpush.msra.mxu0 %v1180
    %1208 = vmatpush.msra.mxu0 %v1179
    %1209 = vmatpush.msra.mxu0 %v1178
    %1210 = vmatmul.f32.gmra.mxu0 %v638
    %v1211 = vpop.f32.mrf.mxu0
    %v1212 = vadd.f32 0.0, %v1211
    %1213 = vmatmul.f32.gmra.mxu0 %v641
    %v1214 = vpop.f32.mrf.mxu0
    %v1215 = vadd.f32 0.0, %v1214
    %1216 = vmatmul.f32.gmra.mxu0 %v644
    %v1217 = vpop.f32.mrf.mxu0
    %v1218 = vadd.f32 0.0, %v1217
    %1219 = vmatmul.f32.gmra.mxu0 %v647
    %v1220 = vpop.f32.mrf.mxu0
    %v1221 = vadd.f32 0.0, %v1220
    %1222 = vmatmul.f32.gmra.mxu0 %v650
    %v1223 = vpop.f32.mrf.mxu0
    %v1224 = vadd.f32 0.0, %v1223
    %1225 = vmatmul.f32.gmra.mxu0 %v653
    %v1226 = vpop.f32.mrf.mxu0
    %v1227 = vadd.f32 0.0, %v1226
    %1228 = vmatmul.f32.gmra.mxu0 %v656
    %v1229 = vpop.f32.mrf.mxu0
    %v1230 = vadd.f32 0.0, %v1229
    %1231 = vmatmul.f32.gmra.mxu0 %v659
    %v1232 = vpop.f32.mrf.mxu0
    %v1233 = vadd.f32 0.0, %v1232
    %1234 = vdwg.mxu0
    %v1235 = vadd.f32 %v141, %v994
    %v1236 = vadd.f32 %v142, %v997
    %v1237 = vadd.f32 %v143, %v1000
    %v1238 = vadd.f32 %v144, %v1003
    %v1239 = vadd.f32 %v145, %v1006
    %v1240 = vadd.f32 %v146, %v1009
    %v1241 = vadd.f32 %v147, %v1012
    %v1242 = vadd.f32 %v148, %v1015
    %v1243 = vadd.f32 %v149, %v1212
    %v1244 = vadd.f32 %v150, %v1215
    %v1245 = vadd.f32 %v151, %v1218
    %v1246 = vadd.f32 %v152, %v1221
    %v1247 = vadd.f32 %v153, %v1224
    %v1248 = vadd.f32 %v154, %v1227
    %v1249 = vadd.f32 %v155, %v1230
    %v1250 = vadd.f32 %v156, %v1233
    %1251 = vadd.xlane.f32.xlu0 %v1235
    %v1252 = vpop.xlane.xlu0 %1251
    %1253 = vadd.xlane.f32.xlu0 %v1236
    %v1254 = vpop.xlane.xlu0 %1253
    %1255 = vadd.xlane.f32.xlu0 %v1237
    %v1256 = vpop.xlane.xlu0 %1255
    %1257 = vadd.xlane.f32.xlu0 %v1238
    %v1258 = vpop.xlane.xlu0 %1257
    %1259 = vadd.xlane.f32.xlu0 %v1239
    %v1260 = vpop.xlane.xlu0 %1259
    %1261 = vadd.xlane.f32.xlu0 %v1240
    %v1262 = vpop.xlane.xlu0 %1261
    %1263 = vadd.xlane.f32.xlu0 %v1241
    %v1264 = vpop.xlane.xlu0 %1263
    %1265 = vadd.xlane.f32.xlu0 %v1242
    %v1266 = vpop.xlane.xlu0 %1265
    %1267 = vadd.xlane.f32.xlu0 %v1243
    %v1268 = vpop.xlane.xlu0 %1267
    %1269 = vadd.xlane.f32.xlu0 %v1244
    %v1270 = vpop.xlane.xlu0 %1269
    %1271 = vadd.xlane.f32.xlu0 %v1245
    %v1272 = vpop.xlane.xlu0 %1271
    %1273 = vadd.xlane.f32.xlu0 %v1246
    %v1274 = vpop.xlane.xlu0 %1273
    %1275 = vadd.xlane.f32.xlu0 %v1247
    %v1276 = vpop.xlane.xlu0 %1275
    %1277 = vadd.xlane.f32.xlu0 %v1248
    %v1278 = vpop.xlane.xlu0 %1277
    %1279 = vadd.xlane.f32.xlu0 %v1249
    %v1280 = vpop.xlane.xlu0 %1279
    %1281 = vadd.xlane.f32.xlu0 %v1250
    %v1282 = vpop.xlane.xlu0 %1281
    %v1283 = vmul.f32 %v1252, %v213
    %v1284 = vmul.f32 %v1254, %v213
    %v1285 = vmul.f32 %v1256, %v213
    %v1286 = vmul.f32 %v1258, %v213
    %v1287 = vmul.f32 %v1260, %v213
    %v1288 = vmul.f32 %v1262, %v213
    %v1289 = vmul.f32 %v1264, %v213
    %v1290 = vmul.f32 %v1266, %v213
    %v1291 = vmul.f32 %v1268, %v213
    %v1292 = vmul.f32 %v1270, %v213
    %v1293 = vmul.f32 %v1272, %v213
    %v1294 = vmul.f32 %v1274, %v213
    %v1295 = vmul.f32 %v1276, %v213
    %v1296 = vmul.f32 %v1278, %v213
    %v1297 = vmul.f32 %v1280, %v213
    %v1298 = vmul.f32 %v1282, %v213
    %v1299 = vsub.f32 %v1235, %v1283
    %v1300 = vsub.f32 %v1236, %v1284
    %v1301 = vsub.f32 %v1237, %v1285
    %v1302 = vsub.f32 %v1238, %v1286
    %v1303 = vsub.f32 %v1239, %v1287
    %v1304 = vsub.f32 %v1240, %v1288
    %v1305 = vsub.f32 %v1241, %v1289
    %v1306 = vsub.f32 %v1242, %v1290
    %v1307 = vsub.f32 %v1243, %v1291
    %v1308 = vsub.f32 %v1244, %v1292
    %v1309 = vsub.f32 %v1245, %v1293
    %v1310 = vsub.f32 %v1246, %v1294
    %v1311 = vsub.f32 %v1247, %v1295
    %v1312 = vsub.f32 %v1248, %v1296
    %v1313 = vsub.f32 %v1249, %v1297
    %v1314 = vsub.f32 %v1250, %v1298
    %v1315 = vmul.f32 %v1299, %v1299
    %v1316 = vmul.f32 %v1300, %v1300
    %v1317 = vmul.f32 %v1301, %v1301
    %v1318 = vmul.f32 %v1302, %v1302
    %v1319 = vmul.f32 %v1303, %v1303
    %v1320 = vmul.f32 %v1304, %v1304
    %v1321 = vmul.f32 %v1305, %v1305
    %v1322 = vmul.f32 %v1306, %v1306
    %v1323 = vmul.f32 %v1307, %v1307
    %v1324 = vmul.f32 %v1308, %v1308
    %v1325 = vmul.f32 %v1309, %v1309
    %v1326 = vmul.f32 %v1310, %v1310
    %v1327 = vmul.f32 %v1311, %v1311
    %v1328 = vmul.f32 %v1312, %v1312
    %v1329 = vmul.f32 %v1313, %v1313
    %v1330 = vmul.f32 %v1314, %v1314
    %1331 = vadd.xlane.f32.xlu0 %v1315
    %v1332 = vpop.xlane.xlu0 %1331
    %1333 = vadd.xlane.f32.xlu0 %v1316
    %v1334 = vpop.xlane.xlu0 %1333
    %1335 = vadd.xlane.f32.xlu0 %v1317
    %v1336 = vpop.xlane.xlu0 %1335
    %1337 = vadd.xlane.f32.xlu0 %v1318
    %v1338 = vpop.xlane.xlu0 %1337
    %1339 = vadd.xlane.f32.xlu0 %v1319
    %v1340 = vpop.xlane.xlu0 %1339
    %1341 = vadd.xlane.f32.xlu0 %v1320
    %v1342 = vpop.xlane.xlu0 %1341
    %1343 = vadd.xlane.f32.xlu0 %v1321
    %v1344 = vpop.xlane.xlu0 %1343
    %1345 = vadd.xlane.f32.xlu0 %v1322
    %v1346 = vpop.xlane.xlu0 %1345
    %1347 = vadd.xlane.f32.xlu0 %v1323
    %v1348 = vpop.xlane.xlu0 %1347
    %1349 = vadd.xlane.f32.xlu0 %v1324
    %v1350 = vpop.xlane.xlu0 %1349
    %1351 = vadd.xlane.f32.xlu0 %v1325
    %v1352 = vpop.xlane.xlu0 %1351
    %1353 = vadd.xlane.f32.xlu0 %v1326
    %v1354 = vpop.xlane.xlu0 %1353
    %1355 = vadd.xlane.f32.xlu0 %v1327
    %v1356 = vpop.xlane.xlu0 %1355
    %1357 = vadd.xlane.f32.xlu0 %v1328
    %v1358 = vpop.xlane.xlu0 %1357
    %1359 = vadd.xlane.f32.xlu0 %v1329
    %v1360 = vpop.xlane.xlu0 %1359
    %1361 = vadd.xlane.f32.xlu0 %v1330
    %v1362 = vpop.xlane.xlu0 %1361
    %v1363 = vmul.f32 %v1332, %v213
    %v1364 = vmul.f32 %v1334, %v213
    %v1365 = vmul.f32 %v1336, %v213
    %v1366 = vmul.f32 %v1338, %v213
    %v1367 = vmul.f32 %v1340, %v213
    %v1368 = vmul.f32 %v1342, %v213
    %v1369 = vmul.f32 %v1344, %v213
    %v1370 = vmul.f32 %v1346, %v213
    %v1371 = vmul.f32 %v1348, %v213
    %v1372 = vmul.f32 %v1350, %v213
    %v1373 = vmul.f32 %v1352, %v213
    %v1374 = vmul.f32 %v1354, %v213
    %v1375 = vmul.f32 %v1356, %v213
    %v1376 = vmul.f32 %v1358, %v213
    %v1377 = vmul.f32 %v1360, %v213
    %v1378 = vmul.f32 %v1362, %v213
    %v1379 = vadd.f32 %v1363, 1e-05
    %v1380 = vadd.f32 %v1364, 1e-05
    %v1381 = vadd.f32 %v1365, 1e-05
    %v1382 = vadd.f32 %v1366, 1e-05
    %v1383 = vadd.f32 %v1367, 1e-05
    %v1384 = vadd.f32 %v1368, 1e-05
    %v1385 = vadd.f32 %v1369, 1e-05
    %v1386 = vadd.f32 %v1370, 1e-05
    %v1387 = vadd.f32 %v1371, 1e-05
    %v1388 = vadd.f32 %v1372, 1e-05
    %v1389 = vadd.f32 %v1373, 1e-05
    %v1390 = vadd.f32 %v1374, 1e-05
    %v1391 = vadd.f32 %v1375, 1e-05
    %v1392 = vadd.f32 %v1376, 1e-05
    %v1393 = vadd.f32 %v1377, 1e-05
    %v1394 = vadd.f32 %v1378, 1e-05
    %v1395 = vrsqrt.pop %v1379
    %v1396 = vmul.f32 %v1395, %v1379
    %v1397 = vmul.f32 %v1396, %v1395
    %v1398 = vmul.f32 0.5, %v1397
    %v1399 = vsub.f32 1.5, %v1398
    %v1400 = vmul.f32 %v1395, %v1399
    %vm1401 = vweird.f32 %v1379
    %vm1402 = vweird.f32 %v1395
    %vm1403 = vmor %vm1401, %vm1402
    %v1404 = vsel %vm1403, %v1395, %v1400
    %v1405 = vrsqrt.pop %v1380
    %v1406 = vmul.f32 %v1405, %v1380
    %v1407 = vmul.f32 %v1406, %v1405
    %v1408 = vmul.f32 0.5, %v1407
    %v1409 = vsub.f32 1.5, %v1408
    %v1410 = vmul.f32 %v1405, %v1409
    %vm1411 = vweird.f32 %v1380
    %vm1412 = vweird.f32 %v1405
    %vm1413 = vmor %vm1411, %vm1412
    %v1414 = vsel %vm1413, %v1405, %v1410
    %v1415 = vrsqrt.pop %v1381
    %v1416 = vmul.f32 %v1415, %v1381
    %v1417 = vmul.f32 %v1416, %v1415
    %v1418 = vmul.f32 0.5, %v1417
    %v1419 = vsub.f32 1.5, %v1418
    %v1420 = vmul.f32 %v1415, %v1419
    %vm1421 = vweird.f32 %v1381
    %vm1422 = vweird.f32 %v1415
    %vm1423 = vmor %vm1421, %vm1422
    %v1424 = vsel %vm1423, %v1415, %v1420
    %v1425 = vrsqrt.pop %v1382
    %v1426 = vmul.f32 %v1425, %v1382
    %v1427 = vmul.f32 %v1426, %v1425
    %v1428 = vmul.f32 0.5, %v1427
    %v1429 = vsub.f32 1.5, %v1428
    %v1430 = vmul.f32 %v1425, %v1429
    %vm1431 = vweird.f32 %v1382
    %vm1432 = vweird.f32 %v1425
    %vm1433 = vmor %vm1431, %vm1432
    %v1434 = vsel %vm1433, %v1425, %v1430
    %v1435 = vrsqrt.pop %v1383
    %v1436 = vmul.f32 %v1435, %v1383
    %v1437 = vmul.f32 %v1436, %v1435
    %v1438 = vmul.f32 0.5, %v1437
    %v1439 = vsub.f32 1.5, %v1438
    %v1440 = vmul.f32 %v1435, %v1439
    %vm1441 = vweird.f32 %v1383
    %vm1442 = vweird.f32 %v1435
    %vm1443 = vmor %vm1441, %vm1442
    %v1444 = vsel %vm1443, %v1435, %v1440
    %v1445 = vrsqrt.pop %v1384
    %v1446 = vmul.f32 %v1445, %v1384
    %v1447 = vmul.f32 %v1446, %v1445
    %v1448 = vmul.f32 0.5, %v1447
    %v1449 = vsub.f32 1.5, %v1448
    %v1450 = vmul.f32 %v1445, %v1449
    %vm1451 = vweird.f32 %v1384
    %vm1452 = vweird.f32 %v1445
    %vm1453 = vmor %vm1451, %vm1452
    %v1454 = vsel %vm1453, %v1445, %v1450
    %v1455 = vrsqrt.pop %v1385
    %v1456 = vmul.f32 %v1455, %v1385
    %v1457 = vmul.f32 %v1456, %v1455
    %v1458 = vmul.f32 0.5, %v1457
    %v1459 = vsub.f32 1.5, %v1458
    %v1460 = vmul.f32 %v1455, %v1459
    %vm1461 = vweird.f32 %v1385
    %vm1462 = vweird.f32 %v1455
    %vm1463 = vmor %vm1461, %vm1462
    %v1464 = vsel %vm1463, %v1455, %v1460
    %v1465 = vrsqrt.pop %v1386
    %v1466 = vmul.f32 %v1465, %v1386
    %v1467 = vmul.f32 %v1466, %v1465
    %v1468 = vmul.f32 0.5, %v1467
    %v1469 = vsub.f32 1.5, %v1468
    %v1470 = vmul.f32 %v1465, %v1469
    %vm1471 = vweird.f32 %v1386
    %vm1472 = vweird.f32 %v1465
    %vm1473 = vmor %vm1471, %vm1472
    %v1474 = vsel %vm1473, %v1465, %v1470
    %v1475 = vrsqrt.pop %v1387
    %v1476 = vmul.f32 %v1475, %v1387
    %v1477 = vmul.f32 %v1476, %v1475
    %v1478 = vmul.f32 0.5, %v1477
    %v1479 = vsub.f32 1.5, %v1478
    %v1480 = vmul.f32 %v1475, %v1479
    %vm1481 = vweird.f32 %v1387
    %vm1482 = vweird.f32 %v1475
    %vm1483 = vmor %vm1481, %vm1482
    %v1484 = vsel %vm1483, %v1475, %v1480
    %v1485 = vrsqrt.pop %v1388
    %v1486 = vmul.f32 %v1485, %v1388
    %v1487 = vmul.f32 %v1486, %v1485
    %v1488 = vmul.f32 0.5, %v1487
    %v1489 = vsub.f32 1.5, %v1488
    %v1490 = vmul.f32 %v1485, %v1489
    %vm1491 = vweird.f32 %v1388
    %vm1492 = vweird.f32 %v1485
    %vm1493 = vmor %vm1491, %vm1492
    %v1494 = vsel %vm1493, %v1485, %v1490
    %v1495 = vrsqrt.pop %v1389
    %v1496 = vmul.f32 %v1495, %v1389
    %v1497 = vmul.f32 %v1496, %v1495
    %v1498 = vmul.f32 0.5, %v1497
    %v1499 = vsub.f32 1.5, %v1498
    %v1500 = vmul.f32 %v1495, %v1499
    %vm1501 = vweird.f32 %v1389
    %vm1502 = vweird.f32 %v1495
    %vm1503 = vmor %vm1501, %vm1502
    %v1504 = vsel %vm1503, %v1495, %v1500
    %v1505 = vrsqrt.pop %v1390
    %v1506 = vmul.f32 %v1505, %v1390
    %v1507 = vmul.f32 %v1506, %v1505
    %v1508 = vmul.f32 0.5, %v1507
    %v1509 = vsub.f32 1.5, %v1508
    %v1510 = vmul.f32 %v1505, %v1509
    %vm1511 = vweird.f32 %v1390
    %vm1512 = vweird.f32 %v1505
    %vm1513 = vmor %vm1511, %vm1512
    %v1514 = vsel %vm1513, %v1505, %v1510
    %v1515 = vrsqrt.pop %v1391
    %v1516 = vmul.f32 %v1515, %v1391
    %v1517 = vmul.f32 %v1516, %v1515
    %v1518 = vmul.f32 0.5, %v1517
    %v1519 = vsub.f32 1.5, %v1518
    %v1520 = vmul.f32 %v1515, %v1519
    %vm1521 = vweird.f32 %v1391
    %vm1522 = vweird.f32 %v1515
    %vm1523 = vmor %vm1521, %vm1522
    %v1524 = vsel %vm1523, %v1515, %v1520
    %v1525 = vrsqrt.pop %v1392
    %v1526 = vmul.f32 %v1525, %v1392
    %v1527 = vmul.f32 %v1526, %v1525
    %v1528 = vmul.f32 0.5, %v1527
    %v1529 = vsub.f32 1.5, %v1528
    %v1530 = vmul.f32 %v1525, %v1529
    %vm1531 = vweird.f32 %v1392
    %vm1532 = vweird.f32 %v1525
    %vm1533 = vmor %vm1531, %vm1532
    %v1534 = vsel %vm1533, %v1525, %v1530
    %v1535 = vrsqrt.pop %v1393
    %v1536 = vmul.f32 %v1535, %v1393
    %v1537 = vmul.f32 %v1536, %v1535
    %v1538 = vmul.f32 0.5, %v1537
    %v1539 = vsub.f32 1.5, %v1538
    %v1540 = vmul.f32 %v1535, %v1539
    %vm1541 = vweird.f32 %v1393
    %vm1542 = vweird.f32 %v1535
    %vm1543 = vmor %vm1541, %vm1542
    %v1544 = vsel %vm1543, %v1535, %v1540
    %v1545 = vrsqrt.pop %v1394
    %v1546 = vmul.f32 %v1545, %v1394
    %v1547 = vmul.f32 %v1546, %v1545
    %v1548 = vmul.f32 0.5, %v1547
    %v1549 = vsub.f32 1.5, %v1548
    %v1550 = vmul.f32 %v1545, %v1549
    %vm1551 = vweird.f32 %v1394
    %vm1552 = vweird.f32 %v1545
    %vm1553 = vmor %vm1551, %vm1552
    %v1554 = vsel %vm1553, %v1545, %v1550
    %v1555 = vmul.f32 %v1299, %v1404
    %v1556 = vmul.f32 %v1300, %v1414
    %v1557 = vmul.f32 %v1301, %v1424
    %v1558 = vmul.f32 %v1302, %v1434
    %v1559 = vmul.f32 %v1303, %v1444
    %v1560 = vmul.f32 %v1304, %v1454
    %v1561 = vmul.f32 %v1305, %v1464
    %v1562 = vmul.f32 %v1306, %v1474
    %v1563 = vmul.f32 %v1307, %v1484
    %v1564 = vmul.f32 %v1308, %v1494
    %v1565 = vmul.f32 %v1309, %v1504
    %v1566 = vmul.f32 %v1310, %v1514
    %v1567 = vmul.f32 %v1311, %v1524
    %v1568 = vmul.f32 %v1312, %v1534
    %v1569 = vmul.f32 %v1313, %v1544
    %v1570 = vmul.f32 %v1314, %v1554
    %v1571 = vmul.f32 %v1555, %v503
    %v1572 = vmul.f32 %v1556, %v503
    %v1573 = vmul.f32 %v1557, %v503
    %v1574 = vmul.f32 %v1558, %v503
    %v1575 = vmul.f32 %v1559, %v503
    %v1576 = vmul.f32 %v1560, %v503
    %v1577 = vmul.f32 %v1561, %v503
    %v1578 = vmul.f32 %v1562, %v503
    %v1579 = vmul.f32 %v1563, %v503
    %v1580 = vmul.f32 %v1564, %v503
    %v1581 = vmul.f32 %v1565, %v503
    %v1582 = vmul.f32 %v1566, %v503
    %v1583 = vmul.f32 %v1567, %v503
    %v1584 = vmul.f32 %v1568, %v503
    %v1585 = vmul.f32 %v1569, %v503
    %v1586 = vmul.f32 %v1570, %v503
    %v1587 = vadd.f32 %v1571, %v522
    %v1588 = vadd.f32 %v1572, %v522
    %v1589 = vadd.f32 %v1573, %v522
    %v1590 = vadd.f32 %v1574, %v522
    %v1591 = vadd.f32 %v1575, %v522
    %v1592 = vadd.f32 %v1576, %v522
    %v1593 = vadd.f32 %v1577, %v522
    %v1594 = vadd.f32 %v1578, %v522
    %v1595 = vadd.f32 %v1579, %v522
    %v1596 = vadd.f32 %v1580, %v522
    %v1597 = vadd.f32 %v1581, %v522
    %v1598 = vadd.f32 %v1582, %v522
    %v1599 = vadd.f32 %v1583, %v522
    %v1600 = vadd.f32 %v1584, %v522
    %v1601 = vadd.f32 %v1585, %v522
    %v1602 = vadd.f32 %v1586, %v522
    %v1603 = vld [vmem:[#allocation11] sm:$0xff]
    %v1604 = vld [vmem:[#allocation11 + $0x8] sm:$0xff]
    %v1605 = vld [vmem:[#allocation11 + $0x10] sm:$0xff]
    %v1606 = vld [vmem:[#allocation11 + $0x18] sm:$0xff]
    %v1607 = vld [vmem:[#allocation11 + $0x20] sm:$0xff]
    %v1608 = vld [vmem:[#allocation11 + $0x28] sm:$0xff]
    %v1609 = vld [vmem:[#allocation11 + $0x30] sm:$0xff]
    %v1610 = vld [vmem:[#allocation11 + $0x38] sm:$0xff]
    %v1611 = vld [vmem:[#allocation11 + $0x40] sm:$0xff]
    %v1612 = vld [vmem:[#allocation11 + $0x48] sm:$0xff]
    %v1613 = vld [vmem:[#allocation11 + $0x50] sm:$0xff]
    %v1614 = vld [vmem:[#allocation11 + $0x58] sm:$0xff]
    %v1615 = vld [vmem:[#allocation11 + $0x60] sm:$0xff]
    %v1616 = vld [vmem:[#allocation11 + $0x68] sm:$0xff]
    %v1617 = vld [vmem:[#allocation11 + $0x70] sm:$0xff]
    %v1618 = vld [vmem:[#allocation11 + $0x78] sm:$0xff]
    %v1619 = vld [vmem:[#allocation11 + $0x80] sm:$0xff]
    %v1620 = vld [vmem:[#allocation11 + $0x88] sm:$0xff]
    %v1621 = vld [vmem:[#allocation11 + $0x90] sm:$0xff]
    %v1622 = vld [vmem:[#allocation11 + $0x98] sm:$0xff]
    %v1623 = vld [vmem:[#allocation11 + $0xa0] sm:$0xff]
    %v1624 = vld [vmem:[#allocation11 + $0xa8] sm:$0xff]
    %v1625 = vld [vmem:[#allocation11 + $0xb0] sm:$0xff]
    %v1626 = vld [vmem:[#allocation11 + $0xb8] sm:$0xff]
    %v1627 = vld [vmem:[#allocation11 + $0xc0] sm:$0xff]
    %v1628 = vld [vmem:[#allocation11 + $0xc8] sm:$0xff]
    %v1629 = vld [vmem:[#allocation11 + $0xd0] sm:$0xff]
    %v1630 = vld [vmem:[#allocation11 + $0xd8] sm:$0xff]
    %v1631 = vld [vmem:[#allocation11 + $0xe0] sm:$0xff]
    %v1632 = vld [vmem:[#allocation11 + $0xe8] sm:$0xff]
    %v1633 = vld [vmem:[#allocation11 + $0xf0] sm:$0xff]
    %v1634 = vld [vmem:[#allocation11 + $0xf8] sm:$0xff]
    %v1635 = vld [vmem:[%s7] sm:$0x3]
    %v1637 = vperm.slane %v1635, 0
    %v1638 = vperm.slane %v1635, 1
    %1641 = vmatpush.msra.mxu0 %v1633
    %1642 = vmatpush.msra.mxu0 %v1631
    %1643 = vmatpush.msra.mxu0 %v1629
    %1644 = vmatpush.msra.mxu0 %v1627
    %1645 = vmatpush.msra.mxu0 %v1625
    %1646 = vmatpush.msra.mxu0 %v1623
    %1647 = vmatpush.msra.mxu0 %v1621
    %1648 = vmatpush.msra.mxu0 %v1619
    %1649 = vmatpush.msra.mxu0 %v1617
    %1650 = vmatpush.msra.mxu0 %v1615
    %1651 = vmatpush.msra.mxu0 %v1613
    %1652 = vmatpush.msra.mxu0 %v1611
    %1653 = vmatpush.msra.mxu0 %v1609
    %1654 = vmatpush.msra.mxu0 %v1607
    %1655 = vmatpush.msra.mxu0 %v1605
    %1656 = vmatpush.msra.mxu0 %v1603
    %1657 = vmatmul.f32.gmra.mxu0 %v1587
    %v1658 = vpop.f32.mrf.mxu0
    %v1659 = vadd.f32 %v1637, %v1658
    %1660 = vmatmul.f32.gmra.mxu0 %v1588
    %v1661 = vpop.f32.mrf.mxu0
    %v1662 = vadd.f32 %v1637, %v1661
    %1663 = vmatmul.f32.gmra.mxu0 %v1589
    %v1664 = vpop.f32.mrf.mxu0
    %v1665 = vadd.f32 %v1637, %v1664
    %1666 = vmatmul.f32.gmra.mxu0 %v1590
    %v1667 = vpop.f32.mrf.mxu0
    %v1668 = vadd.f32 %v1637, %v1667
    %1669 = vmatmul.f32.gmra.mxu0 %v1591
    %v1670 = vpop.f32.mrf.mxu0
    %v1671 = vadd.f32 %v1637, %v1670
    %1672 = vmatmul.f32.gmra.mxu0 %v1592
    %v1673 = vpop.f32.mrf.mxu0
    %v1674 = vadd.f32 %v1637, %v1673
    %1675 = vmatmul.f32.gmra.mxu0 %v1593
    %v1676 = vpop.f32.mrf.mxu0
    %v1677 = vadd.f32 %v1637, %v1676
    %1678 = vmatmul.f32.gmra.mxu0 %v1594
    %v1679 = vpop.f32.mrf.mxu0
    %v1680 = vadd.f32 %v1637, %v1679
    %1681 = vmatmul.f32.gmra.mxu0 %v1595
    %v1682 = vpop.f32.mrf.mxu0
    %v1683 = vadd.f32 %v1637, %v1682
    %1684 = vmatmul.f32.gmra.mxu0 %v1596
    %v1685 = vpop.f32.mrf.mxu0
    %v1686 = vadd.f32 %v1637, %v1685
    %1687 = vmatmul.f32.gmra.mxu0 %v1597
    %v1688 = vpop.f32.mrf.mxu0
    %v1689 = vadd.f32 %v1637, %v1688
    %1690 = vmatmul.f32.gmra.mxu0 %v1598
    %v1691 = vpop.f32.mrf.mxu0
    %v1692 = vadd.f32 %v1637, %v1691
    %1693 = vmatmul.f32.gmra.mxu0 %v1599
    %v1694 = vpop.f32.mrf.mxu0
    %v1695 = vadd.f32 %v1637, %v1694
    %1696 = vmatmul.f32.gmra.mxu0 %v1600
    %v1697 = vpop.f32.mrf.mxu0
    %v1698 = vadd.f32 %v1637, %v1697
    %1699 = vmatmul.f32.gmra.mxu0 %v1601
    %v1700 = vpop.f32.mrf.mxu0
    %v1701 = vadd.f32 %v1637, %v1700
    %1702 = vmatmul.f32.gmra.mxu0 %v1602
    %v1703 = vpop.f32.mrf.mxu0
    %v1704 = vadd.f32 %v1637, %v1703
    %1705 = vdwg.mxu0
    %1706 = vmatpush.msra.mxu0 %v1634
    %1707 = vmatpush.msra.mxu0 %v1632
    %1708 = vmatpush.msra.mxu0 %v1630
    %1709 = vmatpush.msra.mxu0 %v1628
    %1710 = vmatpush.msra.mxu0 %v1626
    %1711 = vmatpush.msra.mxu0 %v1624
    %1712 = vmatpush.msra.mxu0 %v1622
    %1713 = vmatpush.msra.mxu0 %v1620
    %1714 = vmatpush.msra.mxu0 %v1618
    %1715 = vmatpush.msra.mxu0 %v1616
    %1716 = vmatpush.msra.mxu0 %v1614
    %1717 = vmatpush.msra.mxu0 %v1612
    %1718 = vmatpush.msra.mxu0 %v1610
    %1719 = vmatpush.msra.mxu0 %v1608
    %1720 = vmatpush.msra.mxu0 %v1606
    %1721 = vmatpush.msra.mxu0 %v1604
    %1722 = vmatmul.f32.gmra.mxu0 %v1587
    %v1723 = vpop.f32.mrf.mxu0
    %v1724 = vadd.f32 %v1638, %v1723
    %1725 = vmatmul.f32.gmra.mxu0 %v1588
    %v1726 = vpop.f32.mrf.mxu0
    %v1727 = vadd.f32 %v1638, %v1726
    %1728 = vmatmul.f32.gmra.mxu0 %v1589
    %v1729 = vpop.f32.mrf.mxu0
    %v1730 = vadd.f32 %v1638, %v1729
    %1731 = vmatmul.f32.gmra.mxu0 %v1590
    %v1732 = vpop.f32.mrf.mxu0
    %v1733 = vadd.f32 %v1638, %v1732
    %1734 = vmatmul.f32.gmra.mxu0 %v1591
    %v1735 = vpop.f32.mrf.mxu0
    %v1736 = vadd.f32 %v1638, %v1735
    %1737 = vmatmul.f32.gmra.mxu0 %v1592
    %v1738 = vpop.f32.mrf.mxu0
    %v1739 = vadd.f32 %v1638, %v1738
    %1740 = vmatmul.f32.gmra.mxu0 %v1593
    %v1741 = vpop.f32.mrf.mxu0
    %v1742 = vadd.f32 %v1638, %v1741
    %1743 = vmatmul.f32.gmra.mxu0 %v1594
    %v1744 = vpop.f32.mrf.mxu0
    %v1745 = vadd.f32 %v1638, %v1744
    %1746 = vmatmul.f32.gmra.mxu0 %v1595
    %v1747 = vpop.f32.mrf.mxu0
    %v1748 = vadd.f32 %v1638, %v1747
    %1749 = vmatmul.f32.gmra.mxu0 %v1596
    %v1750 = vpop.f32.mrf.mxu0
    %v1751 = vadd.f32 %v1638, %v1750
    %1752 = vmatmul.f32.gmra.mxu0 %v1597
    %v1753 = vpop.f32.mrf.mxu0
    %v1754 = vadd.f32 %v1638, %v1753
    %1755 = vmatmul.f32.gmra.mxu0 %v1598
    %v1756 = vpop.f32.mrf.mxu0
    %v1757 = vadd.f32 %v1638, %v1756
    %1758 = vmatmul.f32.gmra.mxu0 %v1599
    %v1759 = vpop.f32.mrf.mxu0
    %v1760 = vadd.f32 %v1638, %v1759
    %1761 = vmatmul.f32.gmra.mxu0 %v1600
    %v1762 = vpop.f32.mrf.mxu0
    %v1763 = vadd.f32 %v1638, %v1762
    %1764 = vmatmul.f32.gmra.mxu0 %v1601
    %v1765 = vpop.f32.mrf.mxu0
    %v1766 = vadd.f32 %v1638, %v1765
    %1767 = vmatmul.f32.gmra.mxu0 %v1602
    %v1768 = vpop.f32.mrf.mxu0
    %v1769 = vadd.f32 %v1638, %v1768
    %1770 = vdwg.mxu0
    %v1771 = vmax.f32 %v1659, 0.0
    %v1772 = vmax.f32 %v1724, 0.0
    %v1773 = vmax.f32 %v1662, 0.0
    %v1774 = vmax.f32 %v1727, 0.0
    %v1775 = vmax.f32 %v1665, 0.0
    %v1776 = vmax.f32 %v1730, 0.0
    %v1777 = vmax.f32 %v1668, 0.0
    %v1778 = vmax.f32 %v1733, 0.0
    %v1779 = vmax.f32 %v1671, 0.0
    %v1780 = vmax.f32 %v1736, 0.0
    %v1781 = vmax.f32 %v1674, 0.0
    %v1782 = vmax.f32 %v1739, 0.0
    %v1783 = vmax.f32 %v1677, 0.0
    %v1784 = vmax.f32 %v1742, 0.0
    %v1785 = vmax.f32 %v1680, 0.0
    %v1786 = vmax.f32 %v1745, 0.0
    %v1787 = vmax.f32 %v1683, 0.0
    %v1788 = vmax.f32 %v1748, 0.0
    %v1789 = vmax.f32 %v1686, 0.0
    %v1790 = vmax.f32 %v1751, 0.0
    %v1791 = vmax.f32 %v1689, 0.0
    %v1792 = vmax.f32 %v1754, 0.0
    %v1793 = vmax.f32 %v1692, 0.0
    %v1794 = vmax.f32 %v1757, 0.0
    %v1795 = vmax.f32 %v1695, 0.0
    %v1796 = vmax.f32 %v1760, 0.0
    %v1797 = vmax.f32 %v1698, 0.0
    %v1798 = vmax.f32 %v1763, 0.0
    %v1799 = vmax.f32 %v1701, 0.0
    %v1800 = vmax.f32 %v1766, 0.0
    %v1801 = vmax.f32 %v1704, 0.0
    %v1802 = vmax.f32 %v1769, 0.0
    %v1803 = vld [vmem:[#allocation13] sm:$0xff]
    %v1804 = vld [vmem:[#allocation13 + $0x8] sm:$0xff]
    %v1805 = vld [vmem:[#allocation13 + $0x10] sm:$0xff]
    %v1806 = vld [vmem:[#allocation13 + $0x18] sm:$0xff]
    %v1807 = vld [vmem:[#allocation13 + $0x20] sm:$0xff]
    %v1808 = vld [vmem:[#allocation13 + $0x28] sm:$0xff]
    %v1809 = vld [vmem:[#allocation13 + $0x30] sm:$0xff]
    %v1810 = vld [vmem:[#allocation13 + $0x38] sm:$0xff]
    %v1811 = vld [vmem:[#allocation13 + $0x40] sm:$0xff]
    %v1812 = vld [vmem:[#allocation13 + $0x48] sm:$0xff]
    %v1813 = vld [vmem:[#allocation13 + $0x50] sm:$0xff]
    %v1814 = vld [vmem:[#allocation13 + $0x58] sm:$0xff]
    %v1815 = vld [vmem:[#allocation13 + $0x60] sm:$0xff]
    %v1816 = vld [vmem:[#allocation13 + $0x68] sm:$0xff]
    %v1817 = vld [vmem:[#allocation13 + $0x70] sm:$0xff]
    %v1818 = vld [vmem:[#allocation13 + $0x78] sm:$0xff]
    %v1819 = vld [vmem:[#allocation13 + $0x80] sm:$0xff]
    %v1820 = vld [vmem:[#allocation13 + $0x88] sm:$0xff]
    %v1821 = vld [vmem:[#allocation13 + $0x90] sm:$0xff]
    %v1822 = vld [vmem:[#allocation13 + $0x98] sm:$0xff]
    %v1823 = vld [vmem:[#allocation13 + $0xa0] sm:$0xff]
    %v1824 = vld [vmem:[#allocation13 + $0xa8] sm:$0xff]
    %v1825 = vld [vmem:[#allocation13 + $0xb0] sm:$0xff]
    %v1826 = vld [vmem:[#allocation13 + $0xb8] sm:$0xff]
    %v1827 = vld [vmem:[#allocation13 + $0xc0] sm:$0xff]
    %v1828 = vld [vmem:[#allocation13 + $0xc8] sm:$0xff]
    %v1829 = vld [vmem:[#allocation13 + $0xd0] sm:$0xff]
    %v1830 = vld [vmem:[#allocation13 + $0xd8] sm:$0xff]
    %v1831 = vld [vmem:[#allocation13 + $0xe0] sm:$0xff]
    %v1832 = vld [vmem:[#allocation13 + $0xe8] sm:$0xff]
    %v1833 = vld [vmem:[#allocation13 + $0xf0] sm:$0xff]
    %v1834 = vld [vmem:[#allocation13 + $0xf8] sm:$0xff]
    %v1835 = vld [vmem:[%s9] sm:$0x1]
    %v1837 = vperm.slane %v1835, 0
    %1839 = vmatpush.msra.mxu0 %v1818
    %1840 = vmatpush.msra.mxu0 %v1817
    %1841 = vmatpush.msra.mxu0 %v1816
    %1842 = vmatpush.msra.mxu0 %v1815
    %1843 = vmatpush.msra.mxu0 %v1814
    %1844 = vmatpush.msra.mxu0 %v1813
    %1845 = vmatpush.msra.mxu0 %v1812
    %1846 = vmatpush.msra.mxu0 %v1811
    %1847 = vmatpush.msra.mxu0 %v1810
    %1848 = vmatpush.msra.mxu0 %v1809
    %1849 = vmatpush.msra.mxu0 %v1808
    %1850 = vmatpush.msra.mxu0 %v1807
    %1851 = vmatpush.msra.mxu0 %v1806
    %1852 = vmatpush.msra.mxu0 %v1805
    %1853 = vmatpush.msra.mxu0 %v1804
    %1854 = vmatpush.msra.mxu0 %v1803
    %1855 = vmatmul.f32.gmra.mxu0 %v1771
    %v1856 = vpop.f32.mrf.mxu0
    %v1857 = vadd.f32 %v1837, %v1856
    %1858 = vmatmul.f32.gmra.mxu0 %v1773
    %v1859 = vpop.f32.mrf.mxu0
    %v1860 = vadd.f32 %v1837, %v1859
    %1861 = vmatmul.f32.gmra.mxu0 %v1775
    %v1862 = vpop.f32.mrf.mxu0
    %v1863 = vadd.f32 %v1837, %v1862
    %1864 = vmatmul.f32.gmra.mxu0 %v1777
    %v1865 = vpop.f32.mrf.mxu0
    %v1866 = vadd.f32 %v1837, %v1865
    %1867 = vmatmul.f32.gmra.mxu0 %v1779
    %v1868 = vpop.f32.mrf.mxu0
    %v1869 = vadd.f32 %v1837, %v1868
    %1870 = vmatmul.f32.gmra.mxu0 %v1781
    %v1871 = vpop.f32.mrf.mxu0
    %v1872 = vadd.f32 %v1837, %v1871
    %1873 = vmatmul.f32.gmra.mxu0 %v1783
    %v1874 = vpop.f32.mrf.mxu0
    %v1875 = vadd.f32 %v1837, %v1874
    %1876 = vmatmul.f32.gmra.mxu0 %v1785
    %v1877 = vpop.f32.mrf.mxu0
    %v1878 = vadd.f32 %v1837, %v1877
    %1879 = vmatmul.f32.gmra.mxu0 %v1787
    %v1880 = vpop.f32.mrf.mxu0
    %v1881 = vadd.f32 %v1837, %v1880
    %1882 = vmatmul.f32.gmra.mxu0 %v1789
    %v1883 = vpop.f32.mrf.mxu0
    %v1884 = vadd.f32 %v1837, %v1883
    %1885 = vmatmul.f32.gmra.mxu0 %v1791
    %v1886 = vpop.f32.mrf.mxu0
    %v1887 = vadd.f32 %v1837, %v1886
    %1888 = vmatmul.f32.gmra.mxu0 %v1793
    %v1889 = vpop.f32.mrf.mxu0
    %v1890 = vadd.f32 %v1837, %v1889
    %1891 = vmatmul.f32.gmra.mxu0 %v1795
    %v1892 = vpop.f32.mrf.mxu0
    %v1893 = vadd.f32 %v1837, %v1892
    %1894 = vmatmul.f32.gmra.mxu0 %v1797
    %v1895 = vpop.f32.mrf.mxu0
    %v1896 = vadd.f32 %v1837, %v1895
    %1897 = vmatmul.f32.gmra.mxu0 %v1799
    %v1898 = vpop.f32.mrf.mxu0
    %v1899 = vadd.f32 %v1837, %v1898
    %1900 = vmatmul.f32.gmra.mxu0 %v1801
    %v1901 = vpop.f32.mrf.mxu0
    %v1902 = vadd.f32 %v1837, %v1901
    %1903 = vdwg.mxu0
    %1904 = vmatpush.msra.mxu0 %v1834
    %1905 = vmatpush.msra.mxu0 %v1833
    %1906 = vmatpush.msra.mxu0 %v1832
    %1907 = vmatpush.msra.mxu0 %v1831
    %1908 = vmatpush.msra.mxu0 %v1830
    %1909 = vmatpush.msra.mxu0 %v1829
    %1910 = vmatpush.msra.mxu0 %v1828
    %1911 = vmatpush.msra.mxu0 %v1827
    %1912 = vmatpush.msra.mxu0 %v1826
    %1913 = vmatpush.msra.mxu0 %v1825
    %1914 = vmatpush.msra.mxu0 %v1824
    %1915 = vmatpush.msra.mxu0 %v1823
    %1916 = vmatpush.msra.mxu0 %v1822
    %1917 = vmatpush.msra.mxu0 %v1821
    %1918 = vmatpush.msra.mxu0 %v1820
    %1919 = vmatpush.msra.mxu0 %v1819
    %1920 = vmatmul.f32.gmra.mxu0 %v1772
    %v1921 = vpop.f32.mrf.mxu0
    %v1922 = vadd.f32 %v1857, %v1921
    %1923 = vmatmul.f32.gmra.mxu0 %v1774
    %v1924 = vpop.f32.mrf.mxu0
    %v1925 = vadd.f32 %v1860, %v1924
    %1926 = vmatmul.f32.gmra.mxu0 %v1776
    %v1927 = vpop.f32.mrf.mxu0
    %v1928 = vadd.f32 %v1863, %v1927
    %1929 = vmatmul.f32.gmra.mxu0 %v1778
    %v1930 = vpop.f32.mrf.mxu0
    %v1931 = vadd.f32 %v1866, %v1930
    %1932 = vmatmul.f32.gmra.mxu0 %v1780
    %v1933 = vpop.f32.mrf.mxu0
    %v1934 = vadd.f32 %v1869, %v1933
    %1935 = vmatmul.f32.gmra.mxu0 %v1782
    %v1936 = vpop.f32.mrf.mxu0
    %v1937 = vadd.f32 %v1872, %v1936
    %1938 = vmatmul.f32.gmra.mxu0 %v1784
    %v1939 = vpop.f32.mrf.mxu0
    %v1940 = vadd.f32 %v1875, %v1939
    %1941 = vmatmul.f32.gmra.mxu0 %v1786
    %v1942 = vpop.f32.mrf.mxu0
    %v1943 = vadd.f32 %v1878, %v1942
    %1944 = vmatmul.f32.gmra.mxu0 %v1788
    %v1945 = vpop.f32.mrf.mxu0
    %v1946 = vadd.f32 %v1881, %v1945
    %1947 = vmatmul.f32.gmra.mxu0 %v1790
    %v1948 = vpop.f32.mrf.mxu0
    %v1949 = vadd.f32 %v1884, %v1948
    %1950 = vmatmul.f32.gmra.mxu0 %v1792
    %v1951 = vpop.f32.mrf.mxu0
    %v1952 = vadd.f32 %v1887, %v1951
    %1953 = vmatmul.f32.gmra.mxu0 %v1794
    %v1954 = vpop.f32.mrf.mxu0
    %v1955 = vadd.f32 %v1890, %v1954
    %1956 = vmatmul.f32.gmra.mxu0 %v1796
    %v1957 = vpop.f32.mrf.mxu0
    %v1958 = vadd.f32 %v1893, %v1957
    %1959 = vmatmul.f32.gmra.mxu0 %v1798
    %v1960 = vpop.f32.mrf.mxu0
    %v1961 = vadd.f32 %v1896, %v1960
    %1962 = vmatmul.f32.gmra.mxu0 %v1800
    %v1963 = vpop.f32.mrf.mxu0
    %v1964 = vadd.f32 %v1899, %v1963
    %1965 = vmatmul.f32.gmra.mxu0 %v1802
    %v1966 = vpop.f32.mrf.mxu0
    %v1967 = vadd.f32 %v1902, %v1966
    %1968 = vdwg.mxu0
    %v1969 = vadd.f32 %v1235, %v1922
    %v1970 = vadd.f32 %v1236, %v1925
    %v1971 = vadd.f32 %v1237, %v1928
    %v1972 = vadd.f32 %v1238, %v1931
    %v1973 = vadd.f32 %v1239, %v1934
    %v1974 = vadd.f32 %v1240, %v1937
    %v1975 = vadd.f32 %v1241, %v1940
    %v1976 = vadd.f32 %v1242, %v1943
    %v1977 = vadd.f32 %v1243, %v1946
    %v1978 = vadd.f32 %v1244, %v1949
    %v1979 = vadd.f32 %v1245, %v1952
    %v1980 = vadd.f32 %v1246, %v1955
    %v1981 = vadd.f32 %v1247, %v1958
    %v1982 = vadd.f32 %v1248, %v1961
    %v1983 = vadd.f32 %v1249, %v1964
    %v1984 = vadd.f32 %v1250, %v1967
    %1985 = vst [vmem:[#allocation14] sm:$0xff] %v1969
    %1986 = vst [vmem:[#allocation14 + $0x8] sm:$0xff] %v1970
    %1987 = vst [vmem:[#allocation14 + $0x10] sm:$0xff] %v1971
    %1988 = vst [vmem:[#allocation14 + $0x18] sm:$0xff] %v1972
    %1989 = vst [vmem:[#allocation14 + $0x20] sm:$0xff] %v1973
    %1990 = vst [vmem:[#allocation14 + $0x28] sm:$0xff] %v1974
    %1991 = vst [vmem:[#allocation14 + $0x30] sm:$0xff] %v1975
    %1992 = vst [vmem:[#allocation14 + $0x38] sm:$0xff] %v1976
    %1993 = vst [vmem:[#allocation14 + $0x40] sm:$0xff] %v1977
    %1994 = vst [vmem:[#allocation14 + $0x48] sm:$0xff] %v1978
    %1995 = vst [vmem:[#allocation14 + $0x50] sm:$0xff] %v1979
    %1996 = vst [vmem:[#allocation14 + $0x58] sm:$0xff] %v1980
    %1997 = vst [vmem:[#allocation14 + $0x60] sm:$0xff] %v1981
    %1998 = vst [vmem:[#allocation14 + $0x68] sm:$0xff] %v1982
    %1999 = vst [vmem:[#allocation14 + $0x70] sm:$0xff] %v1983
    %2000 = vst [vmem:[#allocation14 + $0x78] sm:$0xff] %v1984
    // Predicated region
    $region70: #{tpu_custom_call.1} parent=1 // pred_check
      _
    $region71: #{tpu_custom_call.1} parent=1 // pred_check_branch
      %2002 = sbr.rel (0) target = $region73
    $region72: #{tpu_custom_call.1} parent=1 // pred_region
      %2004 = vsyncadd [#allocation4], 0
      %s2005 = sshll.u32 [#allocation14], 4
      %s2006 = int_to_ptr.vmem [resolvable:$true] %s2005
      %s2007 = sshll.u32 %s10, 4
      %s2008 = int_to_ptr.hbm [resolvable:$true] %s2007
      %2013 = dma.vmem_to_hbm [thread:$0]  %s2006, 2048, %s2008, [#allocation4], 128, 128, 8
    $region73: #{tpu_custom_call.1} parent=1 // pred_fallthru
      _
    // Predicated region
    $region74: #{tpu_custom_call.1} parent=1 // pred_check
      _
    $region75: #{tpu_custom_call.1} parent=1 // pred_check_branch
      %2015 = sbr.rel (0) target = $region77
    $region76: #{tpu_custom_call.1} parent=1 // pred_region
      %2017 = dma.done [#allocation4], 2048
    $region77: #{tpu_custom_call.1} parent=1 // pred_fallthru
      _
    %2018 = vsyncpa [#allocation3], 1
    %2019 = vsyncpa [#allocation6], 1
    %2020 = vsyncpa [#allocation9], 1
    %2021 = vsyncpa [#allocation12], 1
    %2022 = vsyncpa [#allocation4], 1

</llo_original>
